<compile_context>
chip_gen: v7x
topology: tpu7x:2x2x1
jax: 0.10.0
libtpu: 0.0.40
codegen_flags: <defaults>
</compile_context>

<pallas_src>
import math
from functools import partial

import numpy as np
import jax
import jax.numpy as jnp
from jax import lax
from jax.experimental import pallas as pl
from jax.experimental.pallas import tpu as pltpu

# ----------------------------- constants ------------------------------------
SAMPLE_RATE = 16000
N_FFT = 400
HOP = 160
N_FREQ = N_FFT // 2 + 1          # 201
N_MELS = 80
EXPECTED_SEQ_LENGTH = 3000       # whisper input size (time frames)

# lane-aligned (multiple-of-128) padded sizes
N_FFT_PAD = 512                  # 400 -> 512
N_FREQ_PAD = 256                 # 201 -> 256
N_MELS_PAD = 128                 # 80  -> 128
MAX_TILE_T = 1024                # time tile (sublane dim)


def _round_up(x, m):
    return ((x + m - 1) // m) * m


def _ceil_div(a, b):
    return -(-a // b)


# ----------------------- deterministic parameter setup ----------------------
def _hertz_to_mel_slaney(f):
    f = np.asarray(f, dtype=np.float64)
    min_log_hz, min_log_mel = 1000.0, 15.0
    logstep = 27.0 / np.log(6.4)
    lin = 3.0 * f / 200.0
    return np.where(f >= min_log_hz,
                    min_log_mel + np.log(np.maximum(f, 1e-10) / min_log_hz) * logstep,
                    lin)


def _mel_to_hertz_slaney(m):
    m = np.asarray(m, dtype=np.float64)
    min_log_hz, min_log_mel = 1000.0, 15.0
    logstep = np.log(6.4) / 27.0
    lin = 200.0 * m / 3.0
    return np.where(m >= min_log_mel,
                    min_log_hz * np.exp(logstep * (m - min_log_mel)),
                    lin)


def make_mel_filter_bank(n_freqs=N_FREQ, n_mels=N_MELS, fmin=0.0,
                         fmax=SAMPLE_RATE / 2.0, sr=SAMPLE_RATE):
    """Slaney-scale, slaney-normalized mel filterbank (HF/librosa compatible)."""
    fft_freqs = np.linspace(0.0, sr / 2.0, n_freqs)
    mel_pts = np.linspace(_hertz_to_mel_slaney(fmin), _hertz_to_mel_slaney(fmax),
                          n_mels + 2)
    hz_pts = _mel_to_hertz_slaney(mel_pts)
    fdiff = np.diff(hz_pts)
    ramps = hz_pts[:, None] - fft_freqs[None, :]
    fb = np.zeros((n_mels, n_freqs), dtype=np.float64)
    for i in range(n_mels):
        lower = -ramps[i] / fdiff[i]
        upper = ramps[i + 2] / fdiff[i + 1]
        fb[i] = np.maximum(0.0, np.minimum(lower, upper))
    enorm = 2.0 / (hz_pts[2:n_mels + 2] - hz_pts[:n_mels])
    fb *= enorm[:, None]
    return fb.astype(np.float32)                      # (n_mels, n_freqs)


def hann_window(n=N_FFT):
    # periodic hann (== torch.hann_window(n), HF window_function(n, "hann"))
    i = np.arange(n)
    return (0.5 * (1.0 - np.cos(2.0 * np.pi * i / n))).astype(np.float32)


def make_windowed_dft_cs():
    """Fused [cos | sin] rfft matrix with hann window folded in, zero-padded
    to (N_FFT_PAD, 2 * N_FREQ_PAD)."""
    n = np.arange(N_FFT)[:, None].astype(np.float64)
    k = np.arange(N_FREQ)[None, :].astype(np.float64)
    ang = 2.0 * np.pi * n * k / N_FFT
    win = hann_window().astype(np.float64)[:, None]
    cos_m = np.cos(ang) * win
    sin_m = np.sin(ang) * win
    cs = np.zeros((N_FFT_PAD, 2 * N_FREQ_PAD), dtype=np.float32)
    cs[:N_FFT, :N_FREQ] = cos_m
    cs[:N_FFT, N_FREQ_PAD:N_FREQ_PAD + N_FREQ] = sin_m
    return cs


def make_mel_fb_padded():
    """Transposed mel filterbank zero-padded to (N_FREQ_PAD, N_MELS_PAD)."""
    fb = make_mel_filter_bank()                       # (80, 201)
    out = np.zeros((N_FREQ_PAD, N_MELS_PAD), dtype=np.float32)
    out[:N_FREQ, :N_MELS] = fb.T
    return out


# ------------------------------ Pallas kernel --------------------------------
def logmel_kernel(lens_ref, frames_ref, cs_ref, mel_ref, out_ref, max_sc):
    """One (batch, time-tile) block per grid step.

    lens_ref   : (B,) int32 SMEM  valid frame count per sample (prefetched)
    frames_ref : (1, tile_t, N_FFT_PAD)    bf16 framed waveform (window folded
                                           into cs)
    cs_ref     : (N_FFT_PAD, 2*N_FREQ_PAD) bf16 fused [cos|sin]*window matrix
    mel_ref    : (N_FREQ_PAD, N_MELS_PAD)  bf16 mel filterbank (transposed)
    out_ref    : (1, T_pad, N_MELS_PAD)    f32 per-sample RESIDENT block;
                                           final content is the fully
                                           normalized log-mel features
    max_sc     : (1, N_MELS_PAD) f32 VMEM  per-lane running max
    """
    b = pl.program_id(0)
    t = pl.program_id(1)
    n_t = pl.num_programs(1)
    tile_t = frames_ref.shape[1]

    @pl.when(t == 0)
    def _():
        max_sc[...] = jnp.full(max_sc.shape, -jnp.inf, dtype=max_sc.dtype)

    frames = frames_ref[0]                                   # (tile_t, 512) bf16

    # fused DFT: one bf16 MXU pass producing [re | im] with f32 accumulation
    reim = jnp.dot(frames, cs_ref[...], preferred_element_type=jnp.float32)
    re = reim[:, :N_FREQ_PAD]
    im = reim[:, N_FREQ_PAD:]
    power = re * re + im * im                                # f32 (tile_t, 256)

    # mel projection in bf16 (f32 accumulation) + log10
    mel = jnp.dot(power.astype(jnp.bfloat16), mel_ref[...],
                  preferred_element_type=jnp.float32)        # (tile_t, 128)
    log_spec = jnp.log10(jnp.maximum(mel, 1e-10))

    # write this time tile into the per-sample resident output block
    start = pl.multiple_of(t * tile_t, 8)
    out_ref[0, pl.ds(start, tile_t), :] = log_spec

    # per-lane running max over valid rows (lane mask not needed: padded mel
    # lanes and zero frames give exactly log10(1e-10) = -10 <= any valid value)
    row = t * tile_t + lax.broadcasted_iota(jnp.int32, (tile_t, 1), 0)
    masked = jnp.where(row < lens_ref[b], log_spec, -jnp.inf)
    max_sc[...] = jnp.maximum(max_sc[...], jnp.max(masked, axis=0, keepdims=True))

    # fused per-sample epilogue on the last time tile: clamp at (max - 8),
    # (x + 4)/4, zero rows past the valid frame count — all in VMEM, in place.
    @pl.when(t == n_t - 1)
    def _():
        gmax = jnp.max(max_sc[...])
        x = out_ref[0]                                       # (T_pad, 128) f32
        x = jnp.maximum(x, gmax - 8.0)
        x = (x + 4.0) * 0.25
        rows = lax.broadcasted_iota(jnp.int32, (x.shape[0], 1), 0)
        x = jnp.where(rows < lens_ref[b], x, 0.0)
        out_ref[0] = x


def whisper_logmel(frames, frame_lens, cs_mat, mel_fb, tile_t):
    """frames: (B, T_pad, N_FFT_PAD) bf16 -> normalized log-mel (B, T_pad, 128)."""
    B, T_pad, _ = frames.shape
    n_t = T_pad // tile_t
    grid_spec = pltpu.PrefetchScalarGridSpec(
        num_scalar_prefetch=1,
        grid=(B, n_t),
        in_specs=[
            pl.BlockSpec((1, tile_t, N_FFT_PAD), lambda b, t, lens: (b, t, 0)),
            pl.BlockSpec((N_FFT_PAD, 2 * N_FREQ_PAD), lambda b, t, lens: (0, 0)),
            pl.BlockSpec((N_FREQ_PAD, N_MELS_PAD), lambda b, t, lens: (0, 0)),
        ],
        # resident per-sample output block across the (arbitrary) time axis
        out_specs=pl.BlockSpec((1, T_pad, N_MELS_PAD), lambda b, t, lens: (b, 0, 0)),
        scratch_shapes=[pltpu.VMEM((1, N_MELS_PAD), jnp.float32)],
    )
    return pl.pallas_call(
        logmel_kernel,
        out_shape=jax.ShapeDtypeStruct((B, T_pad, N_MELS_PAD), jnp.float32),
        grid_spec=grid_spec,
        compiler_params=pltpu.CompilerParams(
            dimension_semantics=("parallel", "arbitrary"),
            vmem_limit_bytes=64 * 1024 * 1024),
    )(frame_lens, frames, cs_mat, mel_fb)


# --------------------------- on-device framing glue ---------------------------
def build_frames(waveforms, lengths, t_pad):
    """Reflect-pad (center) + overlapping framing WITHOUT any large gather.

    Uses static slices for the left reflection, one small dynamic_slice +
    dynamic_update_slice for the per-sample right reflection, then a hop
    reshape + three shifted static slices + concat (pure strided copies).

    waveforms: (B, L) f32, lengths: (B,) i32 valid samples.
    Returns (B, t_pad, N_FFT) f32 frames (window NOT applied; it is folded
    into the DFT matrix).  Rows past length//HOP may contain junk — the
    kernel row-masks them for both the max and the final output.
    """
    B, L = waveforms.shape
    half = N_FFT // 2
    rows = max(t_pad + 2, _ceil_div(half + L + half, HOP))
    total = rows * HOP
    tail_len = total - (half + L)          # >= half by construction

    def one(w, length):
        # left reflection (static): padded[i] = w[half - i] for i in [0, half)
        left = w[1:half + 1][::-1]
        core = jnp.concatenate([left, w, jnp.zeros((tail_len,), w.dtype)])
        # right reflection (dynamic, tiny): positions [half+length, half+length+half)
        # must hold w[length-2-j]; valid for length > half (true for real inputs).
        refl = lax.dynamic_slice(w, (length - 1 - half,), (half,))[::-1]
        core = lax.dynamic_update_slice(core, refl, (half + length,))
        # hop reshape: frame j = [r[j], r[j+1], r[j+2][:N_FFT-2*HOP]]
        r = core.reshape(rows, HOP)
        a = r[0:t_pad]
        b = r[1:t_pad + 1]
        c = r[2:t_pad + 2, :N_FFT - 2 * HOP]
        return jnp.concatenate([a, b, c], axis=-1)           # (t_pad, N_FFT)

    return jax.vmap(one)(waveforms, lengths)


@partial(jax.jit, static_argnames=("t_pad", "tile_t", "total_t"))
def _forward_impl(wav, lens_arr, frame_lens, cs_mat, mel_fb, *,
                  t_pad, tile_t, total_t):
    frames = build_frames(wav, lens_arr, t_pad)               # (B, t_pad, 400) f32
    frames = jnp.pad(frames, ((0, 0), (0, 0), (0, N_FFT_PAD - N_FFT)))
    frames = frames.astype(jnp.bfloat16)                      # (B, t_pad, 512)

    feats = whisper_logmel(frames, frame_lens, cs_mat, mel_fb, tile_t)
    feats = feats[:, :, :N_MELS]                              # drop padded mel lanes
    if t_pad >= total_t:
        feats = feats[:, :total_t, :]
    else:
        feats = jnp.pad(feats, ((0, 0), (0, total_t - t_pad), (0, 0)))
    return feats


# ------------------------------- forward wrapper -------------------------------
def whisper_audio_extractor_forward(input_waveforms, input_lengths,
                                    pad_to_whisper_input_size=True,
                                    use_orig_length=True):
    """JAX/Pallas equivalent of WhisperAudioExtractor.forward.

    input_waveforms: (B, L) float32; input_lengths: python list of ints.
    Returns (feats, feats_lens): feats (B, 3000, 80) f32, feats_lens (B,) i32.
    """
    lengths = [int(l) for l in input_lengths]
    frame_counts = [l // HOP for l in lengths]
    B = len(lengths)
    T_max = max(frame_counts)
    tile_t = min(MAX_TILE_T, _round_up(max(T_max, 16), 16))
    T_pad = _round_up(max(T_max, tile_t), tile_t)
    total_t = EXPECTED_SEQ_LENGTH if pad_to_whisper_input_size else T_max

    wav = jnp.asarray(input_waveforms, dtype=jnp.float32)
    lens_arr = jnp.asarray(lengths, dtype=jnp.int32)
    fl = jnp.asarray(frame_counts, dtype=jnp.int32)

    cs_mat = jnp.asarray(make_windowed_dft_cs()).astype(jnp.bfloat16)  # (512,512)
    mel_fb = jnp.asarray(make_mel_fb_padded()).astype(jnp.bfloat16)    # (256,128)

    feats = _forward_impl(wav, lens_arr, fl, cs_mat, mel_fb,
                          t_pad=T_pad, tile_t=tile_t, total_t=total_t)

    if use_orig_length:
        feats_lens = fl
    else:
        feats_lens = jnp.full((B,), EXPECTED_SEQ_LENGTH, dtype=jnp.int32)
    return feats, feats_lens


# ------------------------------ reference (numpy) -----------------------------
def reference_logmel(waveform_np, length):
    """Independent float64 whisper log-mel reference (np.fft.rfft)."""
    window = hann_window()
    mel_fb = make_mel_filter_bank()
    w = np.asarray(waveform_np[:length], dtype=np.float64)
    w = np.pad(w, (N_FFT // 2, N_FFT // 2), mode="reflect")
    T = length // HOP
    idx = np.arange(T)[:, None] * HOP + np.arange(N_FFT)[None, :]
    frames = w[idx] * window[None, :].astype(np.float64)
    spec = np.fft.rfft(frames, n=N_FFT, axis=-1)
    power = np.abs(spec) ** 2                            # (T, N_FREQ)
    mel = power @ mel_fb.astype(np.float64).T            # (T, N_MELS)
    log_spec = np.log10(np.maximum(mel, 1e-10))
    log_spec = np.maximum(log_spec, log_spec.max() - 8.0)
    log_spec = (log_spec + 4.0) / 4.0
    return log_spec.astype(np.float32)


# ----------------------------------- main -------------------------------------
if __name__ == "__main__":
    key = jax.random.PRNGKey(0)
    B = 2
    L = 2560                                    # 16 frames at hop=160
    input_lengths = [2560, 1920]                # per-sample valid lengths
    waveforms = jax.random.uniform(key, (B, L), dtype=jnp.float32,
                                   minval=-1.0, maxval=1.0)

    feats, feats_lens = whisper_audio_extractor_forward(waveforms, input_lengths)
    feats = jax.block_until_ready(feats)
    feats_lens = jax.block_until_ready(feats_lens)

    assert feats.shape == (B, EXPECTED_SEQ_LENGTH, N_MELS)
    assert feats.dtype == jnp.float32
    assert feats_lens.dtype == jnp.int32

    # correctness check against a pure-numpy float64 Whisper log-mel reference.
    # Tolerances account for the bf16 frame/DFT/mel quantization (f32 MXU
    # accumulation); the mean-error bound is the structural-bug discriminator.
    wav_np = np.asarray(waveforms)
    ok = True
    for b in range(B):
        Tb = input_lengths[b] // HOP
        ref = reference_logmel(wav_np[b], input_lengths[b])
        got = np.asarray(feats[b, :Tb, :])
        err = np.abs(got - ref)
        if err.max() > 8e-2 or err.mean() > 5e-3:
            ok = False
        # padded region must be exactly zero
        if not np.all(np.asarray(feats[b, Tb:, :]) == 0.0):
            ok = False
    if not np.array_equal(np.asarray(feats_lens),
                          np.array([l // HOP for l in input_lengths],
                                   dtype=np.int32)):
        ok = False

    if ok:
        print("KERNEL_OK")
    else:
        print("MISMATCH")
</pallas_src>

<mosaic_0001>
module attributes {stable_mosaic.version = 11 : i64} {
  func.func @logmel_kernel(%arg0: i32, %arg1: i32, %arg2: memref<2xi32, #tpu.memory_space<smem>>, %arg3: memref<1x16x512xbf16, #tpu.memory_space<vmem>>, %arg4: memref<512x512xbf16, #tpu.memory_space<vmem>>, %arg5: memref<256x128xbf16, #tpu.memory_space<vmem>>, %arg6: memref<1x16x128xf32, #tpu.memory_space<vmem>>, %arg7: memref<1x128xf32, #tpu.memory_space<vmem>>) attributes {dimension_semantics = [#tpu.dimension_semantics<parallel>, #tpu.dimension_semantics<arbitrary>], iteration_bounds = array<i64: 2, 1>, scalar_prefetch = 1 : i64, scratch_operands = 1 : i64, tpu.core_type = #tpu.core_type<tc>, window_params = [{transform_indices = @transform_0, window_bounds = array<i64: 1, 16, 512>}, {pipeline_mode = #tpu.pipeline_mode<synchronous>, transform_indices = @transform_1, window_bounds = array<i64: 512, 512>}, {pipeline_mode = #tpu.pipeline_mode<synchronous>, transform_indices = @transform_2, window_bounds = array<i64: 256, 128>}, {transform_indices = @transform_3, window_bounds = array<i64: 1, 16, 128>}]} {
    %c0_i32 = arith.constant 0 : i32
    %0 = arith.cmpi eq, %arg1, %c0_i32 : i32
    %1 = arith.extui %0 : i1 to i32
    %c0_i32_0 = arith.constant 0 : i32
    %2 = arith.cmpi ne, %1, %c0_i32_0 : i32
    scf.if %2 {
      %cst_21 = arith.constant 0xFF800000 : f32
      %46 = vector.broadcast %cst_21 : f32 to vector<1x128xf32>
      %c0_22 = arith.constant 0 : index
      %c0_23 = arith.constant 0 : index
      %47 = vector.load %arg7[%c0_22, %c0_23] : memref<1x128xf32, #tpu.memory_space<vmem>>, vector<1x128xf32>
      tpu.vector_store %arg7[%c0_22, %c0_23], %46 {strides = array<i32>} : memref<1x128xf32, #tpu.memory_space<vmem>>, vector<1x128xf32>,
    } else {
    }
    %c0 = arith.constant 0 : index
    %c0_1 = arith.constant 0 : index
    %c0_2 = arith.constant 0 : index
    %3 = vector.load %arg3[%c0, %c0_1, %c0_2] : memref<1x16x512xbf16, #tpu.memory_space<vmem>>, vector<1x16x512xbf16>
    %4 = vector.shape_cast %3 : vector<1x16x512xbf16> to vector<16x512xbf16>
    %c0_3 = arith.constant 0 : index
    %c0_4 = arith.constant 0 : index
    %5 = vector.load %arg4[%c0_3, %c0_4] : memref<512x512xbf16, #tpu.memory_space<vmem>>, vector<512x512xbf16>
    %cst = arith.constant dense<0.000000e+00> : vector<16x512xf32>
    %6 = tpu.matmul %4, %5, %cst {dimension_numbers = #tpu.dot_dimension_numbers<[1], [0], [0], [1], [0, 0, 1, 1], [], []>} : vector<16x512xbf16>, vector<512x512xbf16>, vector<16x512xf32> -> vector<16x512xf32>
    %7 = vector.extract_strided_slice %6 {offsets = [0, 0], sizes = [16, 256], strides = [1, 1]} : vector<16x512xf32> to vector<16x256xf32>
    %8 = vector.extract_strided_slice %6 {offsets = [0, 256], sizes = [16, 256], strides = [1, 1]} : vector<16x512xf32> to vector<16x256xf32>
    %9 = arith.mulf %7, %7 : vector<16x256xf32>
    %10 = arith.mulf %8, %8 : vector<16x256xf32>
    %11 = arith.addf %9, %10 : vector<16x256xf32>
    %12 = arith.truncf %11 : vector<16x256xf32> to vector<16x256xbf16>
    %c0_5 = arith.constant 0 : index
    %c0_6 = arith.constant 0 : index
    %13 = vector.load %arg5[%c0_5, %c0_6] : memref<256x128xbf16, #tpu.memory_space<vmem>>, vector<256x128xbf16>
    %cst_7 = arith.constant dense<0.000000e+00> : vector<16x128xf32>
    %14 = tpu.matmul %12, %13, %cst_7 {dimension_numbers = #tpu.dot_dimension_numbers<[1], [0], [0], [1], [0, 0, 1, 1], [], []>} : vector<16x256xbf16>, vector<256x128xbf16>, vector<16x128xf32> -> vector<16x128xf32>
    %cst_8 = arith.constant 1.000000e-10 : f32
    %15 = vector.broadcast %cst_8 : f32 to vector<16x128xf32>
    %16 = arith.maximumf %14, %15 : vector<16x128xf32>
    %17 = math.log %16 : vector<16x128xf32>
    %cst_9 = arith.constant 0.434294492 : f32
    %18 = vector.broadcast %cst_9 : f32 to vector<16x128xf32>
    %19 = arith.mulf %17, %18 : vector<16x128xf32>
    %c16_i32 = arith.constant 16 : i32
    %20 = arith.muli %arg1, %c16_i32 : i32
    %21 = tpu.assume_multiple %20, 8 : i32
    %c0_10 = arith.constant 0 : index
    %22 = arith.index_cast %21 : i32 to index
    %c0_11 = arith.constant 0 : index
    %23 = vector.load %arg6[%c0_10, %22, %c0_11] : memref<1x16x128xf32, #tpu.memory_space<vmem>>, vector<1x16x128xf32>
    %24 = vector.shape_cast %23 : vector<1x16x128xf32> to vector<16x128xf32>
    %25 = vector.shape_cast %19 : vector<16x128xf32> to vector<1x16x128xf32>
    tpu.vector_store %arg6[%c0_10, %22, %c0_11], %25 {strides = array<i32>} : memref<1x16x128xf32, #tpu.memory_space<vmem>>, vector<1x16x128xf32>,
    %c16_i32_12 = arith.constant 16 : i32
    %26 = arith.muli %arg1, %c16_i32_12 : i32
    %27 = tpu.iota {dimensions = array<i32: 0>} : vector<16x1xi32>
    %28 = vector.broadcast %26 : i32 to vector<16x1xi32>
    %29 = arith.addi %28, %27 : vector<16x1xi32>
    %30 = arith.index_cast %arg0 : i32 to index
    %31 = memref.load %arg2[%30] : memref<2xi32, #tpu.memory_space<smem>>
    %32 = vector.broadcast %31 : i32 to vector<16x1xi32>
    %33 = arith.cmpi slt, %29, %32 : vector<16x1xi32>
    %cst_13 = arith.constant 0xFF800000 : f32
    %34 = vector.shape_cast %33 : vector<16x1xi1> to vector<16x1xi1>
    %35 = vector.broadcast %34 : vector<16x1xi1> to vector<16x128xi1>
    %36 = vector.broadcast %cst_13 : f32 to vector<16x128xf32>
    %37 = arith.select %35, %19, %36 : vector<16x128xi1>, vector<16x128xf32>
    %c0_14 = arith.constant 0 : index
    %c0_15 = arith.constant 0 : index
    %38 = vector.load %arg7[%c0_14, %c0_15] : memref<1x128xf32, #tpu.memory_space<vmem>>, vector<1x128xf32>
    %cst_16 = arith.constant dense<0xFF800000> : vector<128xf32>
    %39 = vector.multi_reduction <maximumf>, %37, %cst_16 [0] : vector<16x128xf32> to vector<128xf32>
    %40 = vector.shape_cast %39 : vector<128xf32> to vector<1x128xf32>
    %41 = arith.maximumf %38, %40 : vector<1x128xf32>
    %c0_17 = arith.constant 0 : index
    %c0_18 = arith.constant 0 : index
    %42 = vector.load %arg7[%c0_17, %c0_18] : memref<1x128xf32, #tpu.memory_space<vmem>>, vector<1x128xf32>
    tpu.vector_store %arg7[%c0_17, %c0_18], %41 {strides = array<i32>} : memref<1x128xf32, #tpu.memory_space<vmem>>, vector<1x128xf32>,
    %c0_i32_19 = arith.constant 0 : i32
    %43 = arith.cmpi eq, %arg1, %c0_i32_19 : i32
    %44 = arith.extui %43 : i1 to i32
    %c0_i32_20 = arith.constant 0 : i32
    %45 = arith.cmpi ne, %44, %c0_i32_20 : i32
    scf.if %45 {
      %c0_21 = arith.constant 0 : index
      %c0_22 = arith.constant 0 : index
      %46 = vector.load %arg7[%c0_21, %c0_22] : memref<1x128xf32, #tpu.memory_space<vmem>>, vector<1x128xf32>
      %47 = vector.shape_cast %46 : vector<1x128xf32> to vector<1x1x128xf32>
      %cst_23 = arith.constant dense<0xFF800000> : vector<1xf32>
      %48 = vector.multi_reduction <maximumf>, %47, %cst_23 [1, 2] : vector<1x1x128xf32> to vector<1xf32>
      %49 = vector.shape_cast %48 : vector<1xf32> to vector<1x1x1xf32>
      %50 = vector.extract %49[0, 0, 0] : f32 from vector<1x1x1xf32>
      %c0_24 = arith.constant 0 : index
      %c0_25 = arith.constant 0 : index
      %c0_26 = arith.constant 0 : index
      %51 = vector.load %arg6[%c0_24, %c0_25, %c0_26] : memref<1x16x128xf32, #tpu.memory_space<vmem>>, vector<1x16x128xf32>
      %52 = vector.shape_cast %51 : vector<1x16x128xf32> to vector<16x128xf32>
      %cst_27 = arith.constant 8.000000e+00 : f32
      %53 = arith.subf %50, %cst_27 : f32
      %54 = vector.broadcast %53 : f32 to vector<16x128xf32>
      %55 = arith.maximumf %52, %54 : vector<16x128xf32>
      %cst_28 = arith.constant 4.000000e+00 : f32
      %56 = vector.broadcast %cst_28 : f32 to vector<16x128xf32>
      %57 = arith.addf %55, %56 : vector<16x128xf32>
      %cst_29 = arith.constant 2.500000e-01 : f32
      %58 = vector.broadcast %cst_29 : f32 to vector<16x128xf32>
      %59 = arith.mulf %57, %58 : vector<16x128xf32>
      %60 = tpu.iota {dimensions = array<i32: 0>} : vector<16x1xi32>
      %61 = arith.index_cast %arg0 : i32 to index
      %62 = memref.load %arg2[%61] : memref<2xi32, #tpu.memory_space<smem>>
      %63 = vector.broadcast %62 : i32 to vector<16x1xi32>
      %64 = arith.cmpi slt, %60, %63 : vector<16x1xi32>
      %cst_30 = arith.constant 0.000000e+00 : f32
      %65 = vector.shape_cast %64 : vector<16x1xi1> to vector<16x1xi1>
      %66 = vector.broadcast %65 : vector<16x1xi1> to vector<16x128xi1>
      %67 = vector.broadcast %cst_30 : f32 to vector<16x128xf32>
      %68 = arith.select %66, %59, %67 : vector<16x128xi1>, vector<16x128xf32>
      %c0_31 = arith.constant 0 : index
      %c0_32 = arith.constant 0 : index
      %c0_33 = arith.constant 0 : index
      %69 = vector.load %arg6[%c0_31, %c0_32, %c0_33] : memref<1x16x128xf32, #tpu.memory_space<vmem>>, vector<1x16x128xf32>
      %70 = vector.shape_cast %69 : vector<1x16x128xf32> to vector<16x128xf32>
      %71 = vector.shape_cast %68 : vector<16x128xf32> to vector<1x16x128xf32>
      tpu.vector_store %arg6[%c0_31, %c0_32, %c0_33], %71 {strides = array<i32>} : memref<1x16x128xf32, #tpu.memory_space<vmem>>, vector<1x16x128xf32>,
    } else {
    }
    return
  }
  func.func @transform_0(%arg0: i32, %arg1: i32, %arg2: memref<2xi32, #tpu.memory_space<smem>>) -> (i32, i32, i32) {
    %c0_i32 = arith.constant 0 : i32
    %c0_i32_0 = arith.constant 0 : i32
    return %arg0, %arg1, %c0_i32 : i32, i32, i32
  }
  func.func @transform_1(%arg0: i32, %arg1: i32, %arg2: memref<2xi32, #tpu.memory_space<smem>>) -> (i32, i32) {
    %c0_i32 = arith.constant 0 : i32
    %c0_i32_0 = arith.constant 0 : i32
    %c0_i32_1 = arith.constant 0 : i32
    return %c0_i32, %c0_i32_0 : i32, i32
  }
  func.func @transform_2(%arg0: i32, %arg1: i32, %arg2: memref<2xi32, #tpu.memory_space<smem>>) -> (i32, i32) {
    %c0_i32 = arith.constant 0 : i32
    %c0_i32_0 = arith.constant 0 : i32
    %c0_i32_1 = arith.constant 0 : i32
    return %c0_i32, %c0_i32_0 : i32, i32
  }
  func.func @transform_3(%arg0: i32, %arg1: i32, %arg2: memref<2xi32, #tpu.memory_space<smem>>) -> (i32, i32, i32) {
    %c0_i32 = arith.constant 0 : i32
    %c0_i32_0 = arith.constant 0 : i32
    %c0_i32_1 = arith.constant 0 : i32
    return %arg0, %c0_i32, %c0_i32_0 : i32, i32, i32
  }
}

</mosaic_0001>

<llo_original>
// kernel: reverse
$region0: #{reverse}
  %s0 = inlined_call_operand.vmem [shape: bf16[2,256], index: 0, kind: input, shape index: {}]
  %s1 = inlined_call_operand.vmem [shape: bf16[2,256], index: 1, kind: output, shape index: {}]
  %v2 = vlaneseq
  %v3 = vsub.s32 127, %v2
  %4 = vset.pattern.permute.xlu0 %v3
  $region1: #{reverse} parent=0
    #allocation0 [shape = 'u8[4096]{0}', space=vmem, size = 0x1000, scoped, tag = 'operand span for operand 0']
    #allocation1 [shape = 'u8[1024]{0}', space=vmem, size = 0x400, scoped, tag = 'packed  for operand 0']
    #allocation2 [shape = 'u8[4096]{0}', space=vmem, size = 0x1000, scoped, tag = 'operand span for operand 1']
    #allocation3 [shape = 'u8[1024]{0}', space=vmem, size = 0x400, scoped, tag = 'packed  for operand 1']
    loop: start=0, step=1, limit=4
    $region2: #{reverse} parent=1 // loop_pre_header
      _
    $region3: #{reverse} parent=1 // loop_header
      %s6 = sphi 0, %s10
      %p7 = scmp.ge.s32.totalorder %s6, 4
      %s13 = sphi 0, %s25
      %s14 = sphi 0, %s21
      %s15 = sphi 0, %s13
      %s16 = sphi 0, %s14
      %s17 = sphi 0, %s15
      %s18 = sphi 0, %s16
    $region4: #{reverse} parent=1 // loop_header_branch
      %9 = sbr.rel (%p7) target = $region8
    $region5: #{reverse} parent=1 // loop_body
      %s11 = ssub.s32 %s6, 1
      %s12 = ssub.s32 %s6, 2
      %s19 = sadd.s32 1, %s14
      %p20 = scmp.ge.s32.totalorder %s19, 2
      %s21 = scalar_select %p20, 0, %s19
      %s22 = sadd.s32 1, %s13
      %s23 = scalar_select %p20, %s22, %s13
      %p24 = scmp.ge.s32.totalorder %s23, 1
      %s25 = scalar_select %p24, 0, %s23
      %p26 = scmp.le.s32.totalorder 1, %s6
      %p27 = scmp.lt.s32.totalorder %s6, 3
      %p28 = pnand %p26, %p27
      %p29 = pneg %p28
      // Predicated region
      $region9: #{reverse} parent=5 // pred_check
        _
      $region10: #{reverse} parent=5 // pred_check_branch
        %31 = sbr.rel (%p28) target = $region12
      $region11: #{reverse} parent=5 // pred_region
        %s32 = ssub.s32 %s6, 1
      $region12: #{reverse} parent=5 // pred_fallthru
        _
      %p33 = scmp.lt.s32.totalorder %s6, 2
      // Predicated region
      $region13: #{reverse} parent=5 // pred_check
        %p34 = pneg %p33
      $region14: #{reverse} parent=5 // pred_check_branch
        %36 = sbr.rel (%p34) target = $region16
      $region15: #{reverse} parent=5 // pred_region
        %s37 = sand.u32 %s6, 1
        %s38 = sand.u32 %s6, 1
        %s39 = scalar_lea.vmem [#allocation1], %s38
        %s40 = ssub.s32 1, %s14
        %s41 = smul.addr %s13, 2
        %s42 = sadd.s32 %s40, %s41
        %s43 = scalar_lea.vmem %s0, %s42
        // Predicated region
        $region17: #{reverse} parent=15 // pred_check
          _
        $region18: #{reverse} parent=15 // pred_check_branch
          %45 = sbr.rel (0) target = $region20
        $region19: #{reverse} parent=15 // pred_region
          // Predicated region
          $region21: #{reverse} parent=19 // pred_check
            _
          $region22: #{reverse} parent=19 // pred_check_branch
            %47 = sbr.rel target = $region24
          $region23: #{reverse} parent=19 // pred_region
            // Predicated region
            $region36: #{reverse} parent=23 // pred_check
              _
            $region37: #{reverse} parent=23 // pred_check_branch
              %62 = sbr.rel (0) target = $region39
            $region38: #{reverse} parent=23 // pred_region
              loop: start=0, step=1, limit=1
              $region40: #{reverse} parent=38 // loop_pre_header
                _
              $region41: #{reverse} parent=38 // loop_header
                %s65 = sphi 0, %s69
                %p66 = scmp.ge.s32.totalorder %s65, 1
                %s70 = sphi %s43, %s43
                %s71 = sphi %s39, %s39
              $region42: #{reverse} parent=38 // loop_header_branch
                %68 = sbr.rel (%p66) target = $region46
              $region43: #{reverse} parent=38 // loop_body
                %v72 = vld [vmem:[%s70] sm:$0x1]
                %73 = vst [vmem:[%s71] sm:$0x1] %v72
              $region44: #{reverse} parent=38 // loop_footer
                %s69 = sadd.s32 1, %s65
              $region45: #{reverse} parent=38 // loop_footer_branch
                %64 = sbr.rel target = $region41
              $region46: #{reverse} parent=38 // loop_exit
                _
            $region39: #{reverse} parent=23 // pred_fallthru
              _
          $region24: #{reverse} parent=19 // pred_fallthru
            _
          // Predicated region
          $region25: #{reverse} parent=19 // pred_check
            _
          $region26: #{reverse} parent=19 // pred_check_branch
            %49 = sbr.rel (0) target = $region28
          $region27: #{reverse} parent=19 // pred_region
            loop: start=0, step=1, limit=1
            $region29: #{reverse} parent=27 // loop_pre_header
              _
            $region30: #{reverse} parent=27 // loop_header
              %s52 = sphi 0, %s56
              %p53 = scmp.ge.s32.totalorder %s52, 1
              %s57 = sphi %s43, %s43
              %s58 = sphi %s39, %s39
            $region31: #{reverse} parent=27 // loop_header_branch
              %55 = sbr.rel (%p53) target = $region35
            $region32: #{reverse} parent=27 // loop_body
              %v59 = vld [vmem:[%s57] sm:$0x1]
              %60 = vst [vmem:[%s58] sm:$0x1] %v59
            $region33: #{reverse} parent=27 // loop_footer
              %s56 = sadd.s32 1, %s52
            $region34: #{reverse} parent=27 // loop_footer_branch
              %51 = sbr.rel target = $region30
            $region35: #{reverse} parent=27 // loop_exit
              _
          $region28: #{reverse} parent=19 // pred_fallthru
            _
        $region20: #{reverse} parent=15 // pred_fallthru
          _
        %74 = vnop
      $region16: #{reverse} parent=5 // pred_fallthru
        _
      %p75 = scmp.le.s32.totalorder 1, %s6
      %p76 = scmp.lt.s32.totalorder %s6, 3
      %p77 = pnand %p75, %p76
      %p78 = pneg %p77
      // Predicated region
      $region47: #{reverse} parent=5 // pred_check
        _
      $region48: #{reverse} parent=5 // pred_check_branch
        %80 = sbr.rel (%p77) target = $region50
      $region49: #{reverse} parent=5 // pred_region
        %s81 = ssub.s32 %s6, 1
        %s82 = sand.u32 %s11, 1
        %s83 = sand.u32 %s11, 1
        %s84 = scalar_lea.vmem [#allocation1], %s83
        %s85 = sand.u32 %s11, 1
        %s86 = sand.u32 %s11, 1
        %s87 = scalar_lea.vmem [#allocation1], %s86
        %s88 = sand.u32 %s11, 1
        %s89 = sand.u32 %s11, 1
        %s90 = scalar_lea.vmem [#allocation3], %s89
        %s92 = smul.u32 1, 2
        %s93 = sshllo.u32 0, %s92
        %s94 = sshrl.u32 %s93, 1
        %s95 = sor.u32 %s93, %s94
        %s96 = sand.u32 %s95, 85
        %s97 = sshrl.u32 %s96, 1
        %s98 = sor.u32 %s96, %s97
        %s99 = sand.u32 51, %s98
        %s100 = sshrl.u32 %s99, 2
        %s101 = sor.u32 %s99, %s100
        %s102 = sand.u32 15, %s101
        %v103 = vld [vmem:[%s87] sm:%s102]
        %v104 = vunpack.c.l.bf16 %v103
        %v105 = vunpack.c.h.bf16 %v103
        %106 = vst [vmem:[#allocation0] sm:%s93] %v104
        %s107 = ssub.s32 1, %s16
        %v108 = vld [vmem:[#allocation0] sm:$0xff]
        %109 = vperm.xlu0 %4, %v108
        %v110 = vpop.permute.xlu0 %109
        %111 = vst [vmem:[#allocation2] sm:$0xff] %v110
        %s113 = smul.u32 1, 2
        %s114 = sshllo.u32 0, %s113
        %s115 = sshrl.u32 %s113, 1
        %v116 = vld [vmem:[#allocation2] sm:%s114]
        %v117 = vpack.c.bf16 0.0, %v116
        %s118 = sshllo.u32 0, %s115
        %119 = vst [vmem:[%s90] sm:%s118] %v117
        %s120 = sand.u32 %s11, 1
        %s121 = sand.u32 %s11, 1
        %s122 = scalar_lea.vmem [#allocation3], %s121
        %s123 = smul.addr %s15, 2
        %s124 = sadd.s32 %s16, %s123
        %s125 = scalar_lea.vmem %s1, %s124
        // Predicated region
        $region51: #{reverse} parent=49 // pred_check
          _
        $region52: #{reverse} parent=49 // pred_check_branch
          %127 = sbr.rel (0) target = $region54
        $region53: #{reverse} parent=49 // pred_region
          // Predicated region
          $region55: #{reverse} parent=53 // pred_check
            _
          $region56: #{reverse} parent=53 // pred_check_branch
            %129 = sbr.rel target = $region58
          $region57: #{reverse} parent=53 // pred_region
            // Predicated region
            $region70: #{reverse} parent=57 // pred_check
              _
            $region71: #{reverse} parent=57 // pred_check_branch
              %144 = sbr.rel (0) target = $region73
            $region72: #{reverse} parent=57 // pred_region
              loop: start=0, step=1, limit=1
              $region74: #{reverse} parent=72 // loop_pre_header
                _
              $region75: #{reverse} parent=72 // loop_header
                %s147 = sphi 0, %s151
                %p148 = scmp.ge.s32.totalorder %s147, 1
                %s152 = sphi %s122, %s122
                %s153 = sphi %s125, %s125
              $region76: #{reverse} parent=72 // loop_header_branch
                %150 = sbr.rel (%p148) target = $region80
              $region77: #{reverse} parent=72 // loop_body
                %v154 = vld [vmem:[%s152] sm:$0x1]
                %155 = vst [vmem:[%s153] sm:$0x1] %v154
              $region78: #{reverse} parent=72 // loop_footer
                %s151 = sadd.s32 1, %s147
              $region79: #{reverse} parent=72 // loop_footer_branch
                %146 = sbr.rel target = $region75
              $region80: #{reverse} parent=72 // loop_exit
                _
            $region73: #{reverse} parent=57 // pred_fallthru
              _
          $region58: #{reverse} parent=53 // pred_fallthru
            _
          // Predicated region
          $region59: #{reverse} parent=53 // pred_check
            _
          $region60: #{reverse} parent=53 // pred_check_branch
            %131 = sbr.rel (0) target = $region62
          $region61: #{reverse} parent=53 // pred_region
            loop: start=0, step=1, limit=1
            $region63: #{reverse} parent=61 // loop_pre_header
              _
            $region64: #{reverse} parent=61 // loop_header
              %s134 = sphi 0, %s138
              %p135 = scmp.ge.s32.totalorder %s134, 1
              %s139 = sphi %s122, %s122
              %s140 = sphi %s125, %s125
            $region65: #{reverse} parent=61 // loop_header_branch
              %137 = sbr.rel (%p135) target = $region69
            $region66: #{reverse} parent=61 // loop_body
              %v141 = vld [vmem:[%s139] sm:$0x1]
              %142 = vst [vmem:[%s140] sm:$0x1] %v141
            $region67: #{reverse} parent=61 // loop_footer
              %s138 = sadd.s32 1, %s134
            $region68: #{reverse} parent=61 // loop_footer_branch
              %133 = sbr.rel target = $region64
            $region69: #{reverse} parent=61 // loop_exit
              _
          $region62: #{reverse} parent=53 // pred_fallthru
            _
        $region54: #{reverse} parent=49 // pred_fallthru
          _
        %156 = vnop
      $region50: #{reverse} parent=5 // pred_fallthru
        _
      %p157 = scmp.le.s32.totalorder 2, %s6
      // Predicated region
      $region81: #{reverse} parent=5 // pred_check
        %p158 = pneg %p157
      $region82: #{reverse} parent=5 // pred_check_branch
        %160 = sbr.rel (%p158) target = $region84
      $region83: #{reverse} parent=5 // pred_region
        %s161 = ssub.s32 %s6, 2
        %s162 = sand.u32 %s12, 1
        %s163 = sand.u32 %s12, 1
        %s164 = scalar_lea.vmem [#allocation3], %s163
      $region84: #{reverse} parent=5 // pred_fallthru
        _
    $region6: #{reverse} parent=1 // loop_footer
      %s10 = sadd.s32 1, %s6
    $region7: #{reverse} parent=1 // loop_footer_branch
      %5 = sbr.rel target = $region3
    $region8: #{reverse} parent=1 // loop_exit
      _

// kernel: custom-call
$region0: #{custom-call}
  %s0 = inlined_call_operand.vmem [shape: bf16[2,200], index: 0, kind: output, shape index: {}]

// kernel: _forward_impl.1
$region0: #{_forward_impl.1}
  #allocation0 [shape = 'u32[]', space=smem, size = 0x4, offset = 0x4, fixed_abs, tag = 'smem constant byte address 0x4 - core index']
  #allocation1 [shape = 'u32[144,128]{1,0:T(1,128)}', space=vmem, size = 0x12000, scoped, tag = 'internal scratch']
  #allocation2 [shape = 'f32[1,128]{1,0:T(1,128)}', space=vmem, size = 0x200, scoped, tag = 'scratch operand']
  #allocation3 [shape = 's32[1]{0}', space=sflag, size = 0x4, scoped, tag = 'scoped memory for _forward_impl.1']
  #allocation4 [shape = 'u8[512]{0}', space=smem, size = 0x200, scoped, tag = 'prefetched SMEM operand 0']
  %s0 = inlined_call_operand.hbm [shape: s32[2], index: 0, kind: input, shape index: {}]
  %s1 = inlined_call_operand.hbm [shape: bf16[2,16,512], index: 1, kind: input, shape index: {}]
  %s2 = inlined_call_operand.hbm [shape: bf16[512,512], index: 2, kind: input, shape index: {}]
  %s3 = inlined_call_operand.hbm [shape: bf16[256,128], index: 3, kind: input, shape index: {}]
  %s4 = inlined_call_operand.hbm [shape: f32[2,16,128], index: 4, kind: output, shape index: {}]
  %s5 = sld [smem:[#allocation0]]
  $region65: #{_forward_impl.1} parent=0
    _
  %s7 = ssub.s32 1, %s5
  %s8 = scalar_select 0, %s7, %s5
  %10 = dma.hbm_to_smem %s0, 16, [#allocation4], [#allocation3]
  %11 = dma.done [#allocation3], 16
  %12 = sfence
  $region1: #{_forward_impl.1} parent=0
    #allocation5 [shape = 'u8[32768]{0}', space=vmem, size = 0x8000, scoped, tag = 'input window, operand 1']
    #allocation6 [shape = 's32[2]{0}', space=sflag, size = 0x8, scoped, tag = 'scoped memory for _forward_impl.1']
    #allocation7 [shape = 's32[2]{0}', space=sflag, size = 0x8, scoped, tag = 'scoped memory for _forward_impl.1']
    #allocation8 [shape = 'u8[524288]{0}', space=vmem, size = 0x80000, scoped, tag = 'input window, operand 2, single buffered']
    #allocation9 [shape = 's32[1]{0}', space=sflag, size = 0x4, scoped, tag = 'scoped memory for _forward_impl.1']
    #allocation10 [shape = 'u8[65536]{0}', space=vmem, size = 0x10000, scoped, tag = 'input window, operand 3, single buffered']
    #allocation11 [shape = 'u8[16384]{0}', space=vmem, size = 0x4000, scoped, tag = 'output window, operand 0']
    %13 = vsyncpa [#allocation6], 0
    %s14 = scalar_lea.sflag [#allocation6], 1
    %15 = vsyncpa %s14, 0
    %16 = vsyncpa [#allocation9], 0
    %17 = vsyncpa [#allocation7], 0
    %s18 = scalar_lea.sflag [#allocation7], 1
    %19 = vsyncpa %s18, 0
    loop: start=0, step=1, limit=4
    $region2: #{_forward_impl.1} parent=1 // loop_pre_header
      _
    $region3: #{_forward_impl.1} parent=1 // loop_header
      %s21 = sphi 0, %s25
      %p22 = scmp.ge.s32.totalorder %s21, 4
      %s28 = sphi 0, %s40
      %s29 = sphi 0, %s36
      %s30 = sphi 0, %s28
      %s31 = sphi 0, %s29
      %s32 = sphi 0, %s30
      %s33 = sphi 0, %s31
      %s45 = sphi 0, %s47
      %s48 = sphi 0, %s45
      %s49 = sphi 0, %s48
      %s65 = sphi 0, %s49
      %s69 = sphi 0, %s69
      %s71 = sphi 0, %s69
      %s72 = sphi 0, %s71
      %s86 = sphi 0, %s72
      %s90 = sphi 0, %s90
      %s92 = sphi 0, %s90
      %s93 = sphi 0, %s92
      %s107 = sphi 0, %s93
      %s113 = sphi 0, %s115
      %s116 = sphi 0, %s113
      %s117 = sphi 0, %s116
      %s133 = sphi 0, %s117
    $region4: #{_forward_impl.1} parent=1 // loop_header_branch
      %24 = sbr.rel (%p22) target = $region8
    $region5: #{_forward_impl.1} parent=1 // loop_body
      %s26 = ssub.s32 %s21, 1
      %s27 = ssub.s32 %s21, 2
      %s34 = sadd.s32 1, %s29
      %p35 = scmp.ge.s32.totalorder %s34, 1
      %s36 = scalar_select %p35, 0, %s34
      %s37 = sadd.s32 1, %s28
      %s38 = scalar_select %p35, %s37, %s28
      %p39 = scmp.ge.s32.totalorder %s38, 2
      %s40 = scalar_select %p39, 0, %s38
      %s41 = ssub.s32 %s28, %s40
      %s42 = ssub.s32 %s29, %s36
      %s43 = sor.u32 %s41, %s42
      %p44 = scmp.eq.s32.totalorder %s43, 0
      %s46 = sadd.s32 %s45, 1
      %s47 = scalar_select %p44, %s45, %s46
      %p50 = pneg %p44
      %p51 = scmp.eq.s32.totalorder %s21, 1
      %p52 = por %p50, %p51
      %p53 = scmp.ne.s32.totalorder %s45, %s48
      %p54 = scmp.eq.s32.totalorder %s21, 0
      %p55 = por %p53, %p54
      %p56 = scmp.ne.s32.totalorder %s45, %s48
      %p57 = scmp.eq.s32.totalorder %s26, 1
      %p58 = por %p56, %p57
      %p59 = scmp.ne.s32.totalorder %s48, %s49
      %p60 = scmp.eq.s32.totalorder %s26, 0
      %p61 = por %p59, %p60
      %p62 = scmp.ne.s32.totalorder %s48, %s49
      %p63 = scmp.eq.s32.totalorder %s27, 1
      %p64 = por %p62, %p63
      %p66 = scmp.ne.s32.totalorder %s49, %s65
      %p67 = scmp.eq.s32.totalorder %s27, 0
      %p68 = por %p66, %p67
      %s70 = sadd.s32 %s69, 1
      %p73 = scmp.eq.s32.totalorder %s21, 1
      %p74 = scmp.ne.s32.totalorder %s69, %s71
      %p75 = scmp.eq.s32.totalorder %s21, 0
      %p76 = por %p74, %p75
      %p77 = scmp.ne.s32.totalorder %s69, %s71
      %p78 = scmp.eq.s32.totalorder %s26, 1
      %p79 = por %p77, %p78
      %p80 = scmp.ne.s32.totalorder %s71, %s72
      %p81 = scmp.eq.s32.totalorder %s26, 0
      %p82 = por %p80, %p81
      %p83 = scmp.ne.s32.totalorder %s71, %s72
      %p84 = scmp.eq.s32.totalorder %s27, 1
      %p85 = por %p83, %p84
      %p87 = scmp.ne.s32.totalorder %s72, %s86
      %p88 = scmp.eq.s32.totalorder %s27, 0
      %p89 = por %p87, %p88
      %s91 = sadd.s32 %s90, 1
      %p94 = scmp.eq.s32.totalorder %s21, 1
      %p95 = scmp.ne.s32.totalorder %s90, %s92
      %p96 = scmp.eq.s32.totalorder %s21, 0
      %p97 = por %p95, %p96
      %p98 = scmp.ne.s32.totalorder %s90, %s92
      %p99 = scmp.eq.s32.totalorder %s26, 1
      %p100 = por %p98, %p99
      %p101 = scmp.ne.s32.totalorder %s92, %s93
      %p102 = scmp.eq.s32.totalorder %s26, 0
      %p103 = por %p101, %p102
      %p104 = scmp.ne.s32.totalorder %s92, %s93
      %p105 = scmp.eq.s32.totalorder %s27, 1
      %p106 = por %p104, %p105
      %p108 = scmp.ne.s32.totalorder %s93, %s107
      %p109 = scmp.eq.s32.totalorder %s27, 0
      %p110 = por %p108, %p109
      %s111 = ssub.s32 %s28, %s40
      %p112 = scmp.eq.s32.totalorder %s111, 0
      %s114 = sadd.s32 %s113, 1
      %s115 = scalar_select %p112, %s113, %s114
      %p118 = pneg %p112
      %p119 = scmp.eq.s32.totalorder %s21, 1
      %p120 = por %p118, %p119
      %p121 = scmp.ne.s32.totalorder %s113, %s116
      %p122 = scmp.eq.s32.totalorder %s21, 0
      %p123 = por %p121, %p122
      %p124 = scmp.ne.s32.totalorder %s113, %s116
      %p125 = scmp.eq.s32.totalorder %s26, 1
      %p126 = por %p124, %p125
      %p127 = scmp.ne.s32.totalorder %s116, %s117
      %p128 = scmp.eq.s32.totalorder %s26, 0
      %p129 = por %p127, %p128
      %p130 = scmp.ne.s32.totalorder %s116, %s117
      %p131 = scmp.eq.s32.totalorder %s27, 1
      %p132 = por %p130, %p131
      %p134 = scmp.ne.s32.totalorder %s117, %s133
      %p135 = scmp.eq.s32.totalorder %s27, 0
      %p136 = por %p134, %p135
      %p137 = scmp.le.s32.totalorder 1, %s21
      %p138 = scmp.lt.s32.totalorder %s21, 3
      %p139 = pnand %p137, %p138
      %p140 = pneg %p139
      // Predicated region
      $region9: #{_forward_impl.1} parent=5 // pred_check
        _
      $region10: #{_forward_impl.1} parent=5 // pred_check_branch
        %142 = sbr.rel (%p139) target = $region12
      $region11: #{_forward_impl.1} parent=5 // pred_region
        %s143 = ssub.s32 %s21, 1
        // Predicated region
        $region13: #{_forward_impl.1} parent=11 // pred_check
          %p144 = pneg %p82
        $region14: #{_forward_impl.1} parent=11 // pred_check_branch
          %146 = sbr.rel (%p144) target = $region16
        $region15: #{_forward_impl.1} parent=11 // pred_region
          %s148 = ssub.s32 16384, 16384
          %149 = vsyncadd [#allocation9], %s148
          %s150 = sshll.u32 [#allocation8], 4
          %s151 = int_to_ptr.vmem [resolvable:$true] %s150
          %156 = dma.hbm_to_vmem [thread:$0]  %s2, 16384, %s151, [#allocation9], 256, 256, 16
        $region16: #{_forward_impl.1} parent=11 // pred_fallthru
          _
        // Predicated region
        $region17: #{_forward_impl.1} parent=11 // pred_check
          %p157 = pneg %p103
        $region18: #{_forward_impl.1} parent=11 // pred_check_branch
          %159 = sbr.rel (%p157) target = $region20
        $region19: #{_forward_impl.1} parent=11 // pred_region
          %s161 = ssub.s32 2048, 2048
          %162 = vsyncadd [#allocation9], %s161
          %s163 = sshll.u32 [#allocation10], 4
          %s164 = int_to_ptr.vmem [resolvable:$true] %s163
          %169 = dma.hbm_to_vmem [thread:$0]  %s3, 2048, %s164, [#allocation9], 64, 64, 4
        $region20: #{_forward_impl.1} parent=11 // pred_fallthru
          _
      $region12: #{_forward_impl.1} parent=5 // pred_fallthru
        _
      %p170 = scmp.lt.s32.totalorder %s21, 2
      // Predicated region
      $region21: #{_forward_impl.1} parent=5 // pred_check
        %p171 = pneg %p170
      $region22: #{_forward_impl.1} parent=5 // pred_check_branch
        %173 = sbr.rel (%p171) target = $region24
      $region23: #{_forward_impl.1} parent=5 // pred_region
        // Predicated region
        $region25: #{_forward_impl.1} parent=23 // pred_check
          %p174 = pneg %p55
        $region26: #{_forward_impl.1} parent=23 // pred_check_branch
          %176 = sbr.rel (%p174) target = $region28
        $region27: #{_forward_impl.1} parent=23 // pred_region
          %s177 = sand.u32 %s45, 1
          %s178 = scalar_lea.sflag [#allocation6], %s177
          %s179 = sand.u32 %s45, 1
          %s180 = smul.addr %s179, 32
          %s181 = scalar_lea.vmem [#allocation5], %s180
          %s182 = smul.u32 2, %s29
          %s184 = ssub.s32 512, 512
          %185 = vsyncadd %s178, %s184
          %s186 = smul.addr %s182, 4
          %s187 = smul.addr %s28, 8
          %s188 = sadd.s32 %s186, %s187
          %s189 = smul.addr %s188, 64
          %s190 = scalar_lea.hbm %s1, %s189
          %s191 = sshll.u32 %s181, 4
          %s192 = int_to_ptr.vmem [resolvable:$true] %s191
          %197 = dma.hbm_to_vmem [thread:$0]  %s190, 512, %s192, %s178, 256, 256, 16
        $region28: #{_forward_impl.1} parent=23 // pred_fallthru
          _
      $region24: #{_forward_impl.1} parent=5 // pred_fallthru
        _
      %p198 = scmp.le.s32.totalorder 1, %s21
      %p199 = scmp.lt.s32.totalorder %s21, 3
      %p200 = pnand %p198, %p199
      %p201 = pneg %p200
      // Predicated region
      $region29: #{_forward_impl.1} parent=5 // pred_check
        _
      $region30: #{_forward_impl.1} parent=5 // pred_check_branch
        %203 = sbr.rel (%p200) target = $region32
      $region31: #{_forward_impl.1} parent=5 // pred_region
        %s204 = ssub.s32 %s21, 1
        %s205 = sand.u32 %s48, 1
        %s206 = scalar_lea.sflag [#allocation6], %s205
        %s207 = sand.u32 %s48, 1
        %s208 = smul.addr %s207, 32
        %s209 = scalar_lea.vmem [#allocation5], %s208
        // Predicated region
        $region33: #{_forward_impl.1} parent=31 // pred_check
          %p210 = pneg %p61
        $region34: #{_forward_impl.1} parent=31 // pred_check_branch
          %212 = sbr.rel (%p210) target = $region36
        $region35: #{_forward_impl.1} parent=31 // pred_region
          %213 = dma.done %s206, 512
        $region36: #{_forward_impl.1} parent=31 // pred_fallthru
          _
        // Predicated region
        $region37: #{_forward_impl.1} parent=31 // pred_check
          %p214 = pneg %p82
        $region38: #{_forward_impl.1} parent=31 // pred_check_branch
          %216 = sbr.rel (%p214) target = $region40
        $region39: #{_forward_impl.1} parent=31 // pred_region
          %217 = dma.done [#allocation9], 16384
        $region40: #{_forward_impl.1} parent=31 // pred_fallthru
          _
        // Predicated region
        $region41: #{_forward_impl.1} parent=31 // pred_check
          %p218 = pneg %p103
        $region42: #{_forward_impl.1} parent=31 // pred_check_branch
          %220 = sbr.rel (%p218) target = $region44
        $region43: #{_forward_impl.1} parent=31 // pred_region
          %221 = dma.done [#allocation9], 2048
        $region44: #{_forward_impl.1} parent=31 // pred_fallthru
          _
        %s222 = sand.u32 %s48, 1
        %s223 = scalar_lea.sflag [#allocation6], %s222
        %s224 = sand.u32 %s48, 1
        %s225 = smul.addr %s224, 32
        %s226 = scalar_lea.vmem [#allocation5], %s225
        %p227 = pneg %p61
        %p228 = pneg %p58
        %p229 = pneg %p82
        %p230 = pneg %p79
        %p231 = pneg %p103
        %p232 = pneg %p100
        %p233 = pneg %p129
        %p234 = pneg %p126
        %s235 = sand.u32 %s116, 1
        %s236 = scalar_lea.sflag [#allocation7], %s235
        %s237 = sand.u32 %s116, 1
        %s238 = smul.addr %s237, 16
        %s239 = scalar_lea.vmem [#allocation11], %s238
        %s240 = smul.u32 2, %s31
        %p242 = scmp.eq.s32.totalorder %s31, 0
        // Predicated region
        $region45: #{_forward_impl.1} parent=31 // pred_check
          %p243 = pneg %p242
        $region46: #{_forward_impl.1} parent=31 // pred_check_branch
          %245 = sbr.rel (%p243) target = $region48
        $region47: #{_forward_impl.1} parent=31 // pred_region
          %246 = vst [vmem:[#allocation2] sm:$0x1] -inf
        $region48: #{_forward_impl.1} parent=31 // pred_fallthru
          _
        %v247 = vld [vmem:[%s209] sm:$0xff]
        %v248 = vld [vmem:[%s209 + $0x8] sm:$0xff]
        %v249 = vld [vmem:[%s209 + $0x10] sm:$0xff]
        %v250 = vld [vmem:[%s209 + $0x18] sm:$0xff]
        %v251 = vld [vmem:[#allocation8] sm:$0xff]
        %v252 = vld [vmem:[#allocation8 + $0x8] sm:$0xff]
        %v253 = vld [vmem:[#allocation8 + $0x10] sm:$0xff]
        %v254 = vld [vmem:[#allocation8 + $0x18] sm:$0xff]
        %v255 = vld [vmem:[#allocation8 + $0x20] sm:$0xff]
        %v256 = vld [vmem:[#allocation8 + $0x28] sm:$0xff]
        %v257 = vld [vmem:[#allocation8 + $0x30] sm:$0xff]
        %v258 = vld [vmem:[#allocation8 + $0x38] sm:$0xff]
        %v259 = vld [vmem:[#allocation8 + $0x40] sm:$0xff]
        %v260 = vld [vmem:[#allocation8 + $0x48] sm:$0xff]
        %v261 = vld [vmem:[#allocation8 + $0x50] sm:$0xff]
        %v262 = vld [vmem:[#allocation8 + $0x58] sm:$0xff]
        %v263 = vld [vmem:[#allocation8 + $0x60] sm:$0xff]
        %v264 = vld [vmem:[#allocation8 + $0x68] sm:$0xff]
        %v265 = vld [vmem:[#allocation8 + $0x70] sm:$0xff]
        %v266 = vld [vmem:[#allocation8 + $0x78] sm:$0xff]
        %v267 = vld [vmem:[#allocation8 + $0x80] sm:$0xff]
        %v268 = vld [vmem:[#allocation8 + $0x88] sm:$0xff]
        %v269 = vld [vmem:[#allocation8 + $0x90] sm:$0xff]
        %v270 = vld [vmem:[#allocation8 + $0x98] sm:$0xff]
        %v271 = vld [vmem:[#allocation8 + $0xa0] sm:$0xff]
        %v272 = vld [vmem:[#allocation8 + $0xa8] sm:$0xff]
        %v273 = vld [vmem:[#allocation8 + $0xb0] sm:$0xff]
        %v274 = vld [vmem:[#allocation8 + $0xb8] sm:$0xff]
        %v275 = vld [vmem:[#allocation8 + $0xc0] sm:$0xff]
        %v276 = vld [vmem:[#allocation8 + $0xc8] sm:$0xff]
        %v277 = vld [vmem:[#allocation8 + $0xd0] sm:$0xff]
        %v278 = vld [vmem:[#allocation8 + $0xd8] sm:$0xff]
        %v279 = vld [vmem:[#allocation8 + $0xe0] sm:$0xff]
        %v280 = vld [vmem:[#allocation8 + $0xe8] sm:$0xff]
        %v281 = vld [vmem:[#allocation8 + $0xf0] sm:$0xff]
        %v282 = vld [vmem:[#allocation8 + $0xf8] sm:$0xff]
        %v283 = vld [vmem:[#allocation8 + $0x100] sm:$0xff]
        %v284 = vld [vmem:[#allocation8 + $0x108] sm:$0xff]
        %v285 = vld [vmem:[#allocation8 + $0x110] sm:$0xff]
        %v286 = vld [vmem:[#allocation8 + $0x118] sm:$0xff]
        %v287 = vld [vmem:[#allocation8 + $0x120] sm:$0xff]
        %v288 = vld [vmem:[#allocation8 + $0x128] sm:$0xff]
        %v289 = vld [vmem:[#allocation8 + $0x130] sm:$0xff]
        %v290 = vld [vmem:[#allocation8 + $0x138] sm:$0xff]
        %v291 = vld [vmem:[#allocation8 + $0x140] sm:$0xff]
        %v292 = vld [vmem:[#allocation8 + $0x148] sm:$0xff]
        %v293 = vld [vmem:[#allocation8 + $0x150] sm:$0xff]
        %v294 = vld [vmem:[#allocation8 + $0x158] sm:$0xff]
        %v295 = vld [vmem:[#allocation8 + $0x160] sm:$0xff]
        %v296 = vld [vmem:[#allocation8 + $0x168] sm:$0xff]
        %v297 = vld [vmem:[#allocation8 + $0x170] sm:$0xff]
        %v298 = vld [vmem:[#allocation8 + $0x178] sm:$0xff]
        %v299 = vld [vmem:[#allocation8 + $0x180] sm:$0xff]
        %v300 = vld [vmem:[#allocation8 + $0x188] sm:$0xff]
        %v301 = vld [vmem:[#allocation8 + $0x190] sm:$0xff]
        %v302 = vld [vmem:[#allocation8 + $0x198] sm:$0xff]
        %v303 = vld [vmem:[#allocation8 + $0x1a0] sm:$0xff]
        %v304 = vld [vmem:[#allocation8 + $0x1a8] sm:$0xff]
        %v305 = vld [vmem:[#allocation8 + $0x1b0] sm:$0xff]
        %v306 = vld [vmem:[#allocation8 + $0x1b8] sm:$0xff]
        %v307 = vld [vmem:[#allocation8 + $0x1c0] sm:$0xff]
        %v308 = vld [vmem:[#allocation8 + $0x1c8] sm:$0xff]
        %v309 = vld [vmem:[#allocation8 + $0x1d0] sm:$0xff]
        %v310 = vld [vmem:[#allocation8 + $0x1d8] sm:$0xff]
        %v311 = vld [vmem:[#allocation8 + $0x1e0] sm:$0xff]
        %v312 = vld [vmem:[#allocation8 + $0x1e8] sm:$0xff]
        %v313 = vld [vmem:[#allocation8 + $0x1f0] sm:$0xff]
        %v314 = vld [vmem:[#allocation8 + $0x1f8] sm:$0xff]
        %v315 = vld [vmem:[#allocation8 + $0x200] sm:$0xff]
        %v316 = vld [vmem:[#allocation8 + $0x208] sm:$0xff]
        %v317 = vld [vmem:[#allocation8 + $0x210] sm:$0xff]
        %v318 = vld [vmem:[#allocation8 + $0x218] sm:$0xff]
        %v319 = vld [vmem:[#allocation8 + $0x220] sm:$0xff]
        %v320 = vld [vmem:[#allocation8 + $0x228] sm:$0xff]
        %v321 = vld [vmem:[#allocation8 + $0x230] sm:$0xff]
        %v322 = vld [vmem:[#allocation8 + $0x238] sm:$0xff]
        %v323 = vld [vmem:[#allocation8 + $0x240] sm:$0xff]
        %v324 = vld [vmem:[#allocation8 + $0x248] sm:$0xff]
        %v325 = vld [vmem:[#allocation8 + $0x250] sm:$0xff]
        %v326 = vld [vmem:[#allocation8 + $0x258] sm:$0xff]
        %v327 = vld [vmem:[#allocation8 + $0x260] sm:$0xff]
        %v328 = vld [vmem:[#allocation8 + $0x268] sm:$0xff]
        %v329 = vld [vmem:[#allocation8 + $0x270] sm:$0xff]
        %v330 = vld [vmem:[#allocation8 + $0x278] sm:$0xff]
        %v331 = vld [vmem:[#allocation8 + $0x280] sm:$0xff]
        %v332 = vld [vmem:[#allocation8 + $0x288] sm:$0xff]
        %v333 = vld [vmem:[#allocation8 + $0x290] sm:$0xff]
        %v334 = vld [vmem:[#allocation8 + $0x298] sm:$0xff]
        %v335 = vld [vmem:[#allocation8 + $0x2a0] sm:$0xff]
        %v336 = vld [vmem:[#allocation8 + $0x2a8] sm:$0xff]
        %v337 = vld [vmem:[#allocation8 + $0x2b0] sm:$0xff]
        %v338 = vld [vmem:[#allocation8 + $0x2b8] sm:$0xff]
        %v339 = vld [vmem:[#allocation8 + $0x2c0] sm:$0xff]
        %v340 = vld [vmem:[#allocation8 + $0x2c8] sm:$0xff]
        %v341 = vld [vmem:[#allocation8 + $0x2d0] sm:$0xff]
        %v342 = vld [vmem:[#allocation8 + $0x2d8] sm:$0xff]
        %v343 = vld [vmem:[#allocation8 + $0x2e0] sm:$0xff]
        %v344 = vld [vmem:[#allocation8 + $0x2e8] sm:$0xff]
        %v345 = vld [vmem:[#allocation8 + $0x2f0] sm:$0xff]
        %v346 = vld [vmem:[#allocation8 + $0x2f8] sm:$0xff]
        %v347 = vld [vmem:[#allocation8 + $0x300] sm:$0xff]
        %v348 = vld [vmem:[#allocation8 + $0x308] sm:$0xff]
        %v349 = vld [vmem:[#allocation8 + $0x310] sm:$0xff]
        %v350 = vld [vmem:[#allocation8 + $0x318] sm:$0xff]
        %v351 = vld [vmem:[#allocation8 + $0x320] sm:$0xff]
        %v352 = vld [vmem:[#allocation8 + $0x328] sm:$0xff]
        %v353 = vld [vmem:[#allocation8 + $0x330] sm:$0xff]
        %v354 = vld [vmem:[#allocation8 + $0x338] sm:$0xff]
        %v355 = vld [vmem:[#allocation8 + $0x340] sm:$0xff]
        %v356 = vld [vmem:[#allocation8 + $0x348] sm:$0xff]
        %v357 = vld [vmem:[#allocation8 + $0x350] sm:$0xff]
        %v358 = vld [vmem:[#allocation8 + $0x358] sm:$0xff]
        %v359 = vld [vmem:[#allocation8 + $0x360] sm:$0xff]
        %v360 = vld [vmem:[#allocation8 + $0x368] sm:$0xff]
        %v361 = vld [vmem:[#allocation8 + $0x370] sm:$0xff]
        %v362 = vld [vmem:[#allocation8 + $0x378] sm:$0xff]
        %v363 = vld [vmem:[#allocation8 + $0x380] sm:$0xff]
        %v364 = vld [vmem:[#allocation8 + $0x388] sm:$0xff]
        %v365 = vld [vmem:[#allocation8 + $0x390] sm:$0xff]
        %v366 = vld [vmem:[#allocation8 + $0x398] sm:$0xff]
        %v367 = vld [vmem:[#allocation8 + $0x3a0] sm:$0xff]
        %v368 = vld [vmem:[#allocation8 + $0x3a8] sm:$0xff]
        %v369 = vld [vmem:[#allocation8 + $0x3b0] sm:$0xff]
        %v370 = vld [vmem:[#allocation8 + $0x3b8] sm:$0xff]
        %v371 = vld [vmem:[#allocation8 + $0x3c0] sm:$0xff]
        %v372 = vld [vmem:[#allocation8 + $0x3c8] sm:$0xff]
        %v373 = vld [vmem:[#allocation8 + $0x3d0] sm:$0xff]
        %v374 = vld [vmem:[#allocation8 + $0x3d8] sm:$0xff]
        %v375 = vld [vmem:[#allocation8 + $0x3e0] sm:$0xff]
        %v376 = vld [vmem:[#allocation8 + $0x3e8] sm:$0xff]
        %v377 = vld [vmem:[#allocation8 + $0x3f0] sm:$0xff]
        %v378 = vld [vmem:[#allocation8 + $0x3f8] sm:$0xff]
        %v383 = vunpack.c.l.b16 %v247
        %v384 = vunpack.c.h.b16 %v247
        %v385 = vunpack.c.l.b16 %v248
        %v386 = vunpack.c.h.b16 %v248
        %v387 = vunpack.c.l.b16 %v249
        %v388 = vunpack.c.h.b16 %v249
        %v389 = vunpack.c.l.b16 %v250
        %v390 = vunpack.c.h.b16 %v250
        %v391 = vpack.c.b16 %v387, %v383
        %v392 = vpack.c.b16 %v388, %v384
        %v393 = vpack.c.b16 %v389, %v385
        %v394 = vpack.c.b16 %v390, %v386
        %v527 = vunpack.c.l.b16 %v251
        %v528 = vunpack.c.h.b16 %v251
        %v529 = vunpack.c.l.b16 %v252
        %v530 = vunpack.c.h.b16 %v252
        %v531 = vunpack.c.l.b16 %v253
        %v532 = vunpack.c.h.b16 %v253
        %v533 = vunpack.c.l.b16 %v254
        %v534 = vunpack.c.h.b16 %v254
        %v535 = vunpack.c.l.b16 %v255
        %v536 = vunpack.c.h.b16 %v255
        %v537 = vunpack.c.l.b16 %v256
        %v538 = vunpack.c.h.b16 %v256
        %v539 = vunpack.c.l.b16 %v257
        %v540 = vunpack.c.h.b16 %v257
        %v541 = vunpack.c.l.b16 %v258
        %v542 = vunpack.c.h.b16 %v258
        %v543 = vunpack.c.l.b16 %v259
        %v544 = vunpack.c.h.b16 %v259
        %v545 = vunpack.c.l.b16 %v260
        %v546 = vunpack.c.h.b16 %v260
        %v547 = vunpack.c.l.b16 %v261
        %v548 = vunpack.c.h.b16 %v261
        %v549 = vunpack.c.l.b16 %v262
        %v550 = vunpack.c.h.b16 %v262
        %v551 = vunpack.c.l.b16 %v263
        %v552 = vunpack.c.h.b16 %v263
        %v553 = vunpack.c.l.b16 %v264
        %v554 = vunpack.c.h.b16 %v264
        %v555 = vunpack.c.l.b16 %v265
        %v556 = vunpack.c.h.b16 %v265
        %v557 = vunpack.c.l.b16 %v266
        %v558 = vunpack.c.h.b16 %v266
        %v559 = vunpack.c.l.b16 %v267
        %v560 = vunpack.c.h.b16 %v267
        %v561 = vunpack.c.l.b16 %v268
        %v562 = vunpack.c.h.b16 %v268
        %v563 = vunpack.c.l.b16 %v269
        %v564 = vunpack.c.h.b16 %v269
        %v565 = vunpack.c.l.b16 %v270
        %v566 = vunpack.c.h.b16 %v270
        %v567 = vunpack.c.l.b16 %v271
        %v568 = vunpack.c.h.b16 %v271
        %v569 = vunpack.c.l.b16 %v272
        %v570 = vunpack.c.h.b16 %v272
        %v571 = vunpack.c.l.b16 %v273
        %v572 = vunpack.c.h.b16 %v273
        %v573 = vunpack.c.l.b16 %v274
        %v574 = vunpack.c.h.b16 %v274
        %v575 = vunpack.c.l.b16 %v275
        %v576 = vunpack.c.h.b16 %v275
        %v577 = vunpack.c.l.b16 %v276
        %v578 = vunpack.c.h.b16 %v276
        %v579 = vunpack.c.l.b16 %v277
        %v580 = vunpack.c.h.b16 %v277
        %v581 = vunpack.c.l.b16 %v278
        %v582 = vunpack.c.h.b16 %v278
        %v583 = vunpack.c.l.b16 %v279
        %v584 = vunpack.c.h.b16 %v279
        %v585 = vunpack.c.l.b16 %v280
        %v586 = vunpack.c.h.b16 %v280
        %v587 = vunpack.c.l.b16 %v281
        %v588 = vunpack.c.h.b16 %v281
        %v589 = vunpack.c.l.b16 %v282
        %v590 = vunpack.c.h.b16 %v282
        %v591 = vunpack.c.l.b16 %v283
        %v592 = vunpack.c.h.b16 %v283
        %v593 = vunpack.c.l.b16 %v284
        %v594 = vunpack.c.h.b16 %v284
        %v595 = vunpack.c.l.b16 %v285
        %v596 = vunpack.c.h.b16 %v285
        %v597 = vunpack.c.l.b16 %v286
        %v598 = vunpack.c.h.b16 %v286
        %v599 = vunpack.c.l.b16 %v287
        %v600 = vunpack.c.h.b16 %v287
        %v601 = vunpack.c.l.b16 %v288
        %v602 = vunpack.c.h.b16 %v288
        %v603 = vunpack.c.l.b16 %v289
        %v604 = vunpack.c.h.b16 %v289
        %v605 = vunpack.c.l.b16 %v290
        %v606 = vunpack.c.h.b16 %v290
        %v607 = vunpack.c.l.b16 %v291
        %v608 = vunpack.c.h.b16 %v291
        %v609 = vunpack.c.l.b16 %v292
        %v610 = vunpack.c.h.b16 %v292
        %v611 = vunpack.c.l.b16 %v293
        %v612 = vunpack.c.h.b16 %v293
        %v613 = vunpack.c.l.b16 %v294
        %v614 = vunpack.c.h.b16 %v294
        %v615 = vunpack.c.l.b16 %v295
        %v616 = vunpack.c.h.b16 %v295
        %v617 = vunpack.c.l.b16 %v296
        %v618 = vunpack.c.h.b16 %v296
        %v619 = vunpack.c.l.b16 %v297
        %v620 = vunpack.c.h.b16 %v297
        %v621 = vunpack.c.l.b16 %v298
        %v622 = vunpack.c.h.b16 %v298
        %v623 = vunpack.c.l.b16 %v299
        %v624 = vunpack.c.h.b16 %v299
        %v625 = vunpack.c.l.b16 %v300
        %v626 = vunpack.c.h.b16 %v300
        %v627 = vunpack.c.l.b16 %v301
        %v628 = vunpack.c.h.b16 %v301
        %v629 = vunpack.c.l.b16 %v302
        %v630 = vunpack.c.h.b16 %v302
        %v631 = vunpack.c.l.b16 %v303
        %v632 = vunpack.c.h.b16 %v303
        %v633 = vunpack.c.l.b16 %v304
        %v634 = vunpack.c.h.b16 %v304
        %v635 = vunpack.c.l.b16 %v305
        %v636 = vunpack.c.h.b16 %v305
        %v637 = vunpack.c.l.b16 %v306
        %v638 = vunpack.c.h.b16 %v306
        %v639 = vunpack.c.l.b16 %v307
        %v640 = vunpack.c.h.b16 %v307
        %v641 = vunpack.c.l.b16 %v308
        %v642 = vunpack.c.h.b16 %v308
        %v643 = vunpack.c.l.b16 %v309
        %v644 = vunpack.c.h.b16 %v309
        %v645 = vunpack.c.l.b16 %v310
        %v646 = vunpack.c.h.b16 %v310
        %v647 = vunpack.c.l.b16 %v311
        %v648 = vunpack.c.h.b16 %v311
        %v649 = vunpack.c.l.b16 %v312
        %v650 = vunpack.c.h.b16 %v312
        %v651 = vunpack.c.l.b16 %v313
        %v652 = vunpack.c.h.b16 %v313
        %v653 = vunpack.c.l.b16 %v314
        %v654 = vunpack.c.h.b16 %v314
        %v655 = vunpack.c.l.b16 %v315
        %v656 = vunpack.c.h.b16 %v315
        %v657 = vunpack.c.l.b16 %v316
        %v658 = vunpack.c.h.b16 %v316
        %v659 = vunpack.c.l.b16 %v317
        %v660 = vunpack.c.h.b16 %v317
        %v661 = vunpack.c.l.b16 %v318
        %v662 = vunpack.c.h.b16 %v318
        %v663 = vunpack.c.l.b16 %v319
        %v664 = vunpack.c.h.b16 %v319
        %v665 = vunpack.c.l.b16 %v320
        %v666 = vunpack.c.h.b16 %v320
        %v667 = vunpack.c.l.b16 %v321
        %v668 = vunpack.c.h.b16 %v321
        %v669 = vunpack.c.l.b16 %v322
        %v670 = vunpack.c.h.b16 %v322
        %v671 = vunpack.c.l.b16 %v323
        %v672 = vunpack.c.h.b16 %v323
        %v673 = vunpack.c.l.b16 %v324
        %v674 = vunpack.c.h.b16 %v324
        %v675 = vunpack.c.l.b16 %v325
        %v676 = vunpack.c.h.b16 %v325
        %v677 = vunpack.c.l.b16 %v326
        %v678 = vunpack.c.h.b16 %v326
        %v679 = vunpack.c.l.b16 %v327
        %v680 = vunpack.c.h.b16 %v327
        %v681 = vunpack.c.l.b16 %v328
        %v682 = vunpack.c.h.b16 %v328
        %v683 = vunpack.c.l.b16 %v329
        %v684 = vunpack.c.h.b16 %v329
        %v685 = vunpack.c.l.b16 %v330
        %v686 = vunpack.c.h.b16 %v330
        %v687 = vunpack.c.l.b16 %v331
        %v688 = vunpack.c.h.b16 %v331
        %v689 = vunpack.c.l.b16 %v332
        %v690 = vunpack.c.h.b16 %v332
        %v691 = vunpack.c.l.b16 %v333
        %v692 = vunpack.c.h.b16 %v333
        %v693 = vunpack.c.l.b16 %v334
        %v694 = vunpack.c.h.b16 %v334
        %v695 = vunpack.c.l.b16 %v335
        %v696 = vunpack.c.h.b16 %v335
        %v697 = vunpack.c.l.b16 %v336
        %v698 = vunpack.c.h.b16 %v336
        %v699 = vunpack.c.l.b16 %v337
        %v700 = vunpack.c.h.b16 %v337
        %v701 = vunpack.c.l.b16 %v338
        %v702 = vunpack.c.h.b16 %v338
        %v703 = vunpack.c.l.b16 %v339
        %v704 = vunpack.c.h.b16 %v339
        %v705 = vunpack.c.l.b16 %v340
        %v706 = vunpack.c.h.b16 %v340
        %v707 = vunpack.c.l.b16 %v341
        %v708 = vunpack.c.h.b16 %v341
        %v709 = vunpack.c.l.b16 %v342
        %v710 = vunpack.c.h.b16 %v342
        %v711 = vunpack.c.l.b16 %v343
        %v712 = vunpack.c.h.b16 %v343
        %v713 = vunpack.c.l.b16 %v344
        %v714 = vunpack.c.h.b16 %v344
        %v715 = vunpack.c.l.b16 %v345
        %v716 = vunpack.c.h.b16 %v345
        %v717 = vunpack.c.l.b16 %v346
        %v718 = vunpack.c.h.b16 %v346
        %v719 = vunpack.c.l.b16 %v347
        %v720 = vunpack.c.h.b16 %v347
        %v721 = vunpack.c.l.b16 %v348
        %v722 = vunpack.c.h.b16 %v348
        %v723 = vunpack.c.l.b16 %v349
        %v724 = vunpack.c.h.b16 %v349
        %v725 = vunpack.c.l.b16 %v350
        %v726 = vunpack.c.h.b16 %v350
        %v727 = vunpack.c.l.b16 %v351
        %v728 = vunpack.c.h.b16 %v351
        %v729 = vunpack.c.l.b16 %v352
        %v730 = vunpack.c.h.b16 %v352
        %v731 = vunpack.c.l.b16 %v353
        %v732 = vunpack.c.h.b16 %v353
        %v733 = vunpack.c.l.b16 %v354
        %v734 = vunpack.c.h.b16 %v354
        %v735 = vunpack.c.l.b16 %v355
        %v736 = vunpack.c.h.b16 %v355
        %v737 = vunpack.c.l.b16 %v356
        %v738 = vunpack.c.h.b16 %v356
        %v739 = vunpack.c.l.b16 %v357
        %v740 = vunpack.c.h.b16 %v357
        %v741 = vunpack.c.l.b16 %v358
        %v742 = vunpack.c.h.b16 %v358
        %v743 = vunpack.c.l.b16 %v359
        %v744 = vunpack.c.h.b16 %v359
        %v745 = vunpack.c.l.b16 %v360
        %v746 = vunpack.c.h.b16 %v360
        %v747 = vunpack.c.l.b16 %v361
        %v748 = vunpack.c.h.b16 %v361
        %v749 = vunpack.c.l.b16 %v362
        %v750 = vunpack.c.h.b16 %v362
        %v751 = vunpack.c.l.b16 %v363
        %v752 = vunpack.c.h.b16 %v363
        %v753 = vunpack.c.l.b16 %v364
        %v754 = vunpack.c.h.b16 %v364
        %v755 = vunpack.c.l.b16 %v365
        %v756 = vunpack.c.h.b16 %v365
        %v757 = vunpack.c.l.b16 %v366
        %v758 = vunpack.c.h.b16 %v366
        %v759 = vunpack.c.l.b16 %v367
        %v760 = vunpack.c.h.b16 %v367
        %v761 = vunpack.c.l.b16 %v368
        %v762 = vunpack.c.h.b16 %v368
        %v763 = vunpack.c.l.b16 %v369
        %v764 = vunpack.c.h.b16 %v369
        %v765 = vunpack.c.l.b16 %v370
        %v766 = vunpack.c.h.b16 %v370
        %v767 = vunpack.c.l.b16 %v371
        %v768 = vunpack.c.h.b16 %v371
        %v769 = vunpack.c.l.b16 %v372
        %v770 = vunpack.c.h.b16 %v372
        %v771 = vunpack.c.l.b16 %v373
        %v772 = vunpack.c.h.b16 %v373
        %v773 = vunpack.c.l.b16 %v374
        %v774 = vunpack.c.h.b16 %v374
        %v775 = vunpack.c.l.b16 %v375
        %v776 = vunpack.c.h.b16 %v375
        %v777 = vunpack.c.l.b16 %v376
        %v778 = vunpack.c.h.b16 %v376
        %v779 = vunpack.c.l.b16 %v377
        %v780 = vunpack.c.h.b16 %v377
        %v781 = vunpack.c.l.b16 %v378
        %v782 = vunpack.c.h.b16 %v378
        %v783 = vpack.c.b16 %v531, %v527
        %v784 = vpack.c.b16 %v532, %v528
        %v785 = vpack.c.b16 %v533, %v529
        %v786 = vpack.c.b16 %v534, %v530
        %v787 = vpack.c.b16 %v539, %v535
        %v788 = vpack.c.b16 %v540, %v536
        %v789 = vpack.c.b16 %v541, %v537
        %v790 = vpack.c.b16 %v542, %v538
        %v791 = vpack.c.b16 %v547, %v543
        %v792 = vpack.c.b16 %v548, %v544
        %v793 = vpack.c.b16 %v549, %v545
        %v794 = vpack.c.b16 %v550, %v546
        %v795 = vpack.c.b16 %v555, %v551
        %v796 = vpack.c.b16 %v556, %v552
        %v797 = vpack.c.b16 %v557, %v553
        %v798 = vpack.c.b16 %v558, %v554
        %v799 = vpack.c.b16 %v563, %v559
        %v800 = vpack.c.b16 %v564, %v560
        %v801 = vpack.c.b16 %v565, %v561
        %v802 = vpack.c.b16 %v566, %v562
        %v803 = vpack.c.b16 %v571, %v567
        %v804 = vpack.c.b16 %v572, %v568
        %v805 = vpack.c.b16 %v573, %v569
        %v806 = vpack.c.b16 %v574, %v570
        %v807 = vpack.c.b16 %v579, %v575
        %v808 = vpack.c.b16 %v580, %v576
        %v809 = vpack.c.b16 %v581, %v577
        %v810 = vpack.c.b16 %v582, %v578
        %v811 = vpack.c.b16 %v587, %v583
        %v812 = vpack.c.b16 %v588, %v584
        %v813 = vpack.c.b16 %v589, %v585
        %v814 = vpack.c.b16 %v590, %v586
        %v815 = vpack.c.b16 %v595, %v591
        %v816 = vpack.c.b16 %v596, %v592
        %v817 = vpack.c.b16 %v597, %v593
        %v818 = vpack.c.b16 %v598, %v594
        %v819 = vpack.c.b16 %v603, %v599
        %v820 = vpack.c.b16 %v604, %v600
        %v821 = vpack.c.b16 %v605, %v601
        %v822 = vpack.c.b16 %v606, %v602
        %v823 = vpack.c.b16 %v611, %v607
        %v824 = vpack.c.b16 %v612, %v608
        %v825 = vpack.c.b16 %v613, %v609
        %v826 = vpack.c.b16 %v614, %v610
        %v827 = vpack.c.b16 %v619, %v615
        %v828 = vpack.c.b16 %v620, %v616
        %v829 = vpack.c.b16 %v621, %v617
        %v830 = vpack.c.b16 %v622, %v618
        %v831 = vpack.c.b16 %v627, %v623
        %v832 = vpack.c.b16 %v628, %v624
        %v833 = vpack.c.b16 %v629, %v625
        %v834 = vpack.c.b16 %v630, %v626
        %v835 = vpack.c.b16 %v635, %v631
        %v836 = vpack.c.b16 %v636, %v632
        %v837 = vpack.c.b16 %v637, %v633
        %v838 = vpack.c.b16 %v638, %v634
        %v839 = vpack.c.b16 %v643, %v639
        %v840 = vpack.c.b16 %v644, %v640
        %v841 = vpack.c.b16 %v645, %v641
        %v842 = vpack.c.b16 %v646, %v642
        %v843 = vpack.c.b16 %v651, %v647
        %v844 = vpack.c.b16 %v652, %v648
        %v845 = vpack.c.b16 %v653, %v649
        %v846 = vpack.c.b16 %v654, %v650
        %v847 = vpack.c.b16 %v659, %v655
        %v848 = vpack.c.b16 %v660, %v656
        %v849 = vpack.c.b16 %v661, %v657
        %v850 = vpack.c.b16 %v662, %v658
        %v851 = vpack.c.b16 %v667, %v663
        %v852 = vpack.c.b16 %v668, %v664
        %v853 = vpack.c.b16 %v669, %v665
        %v854 = vpack.c.b16 %v670, %v666
        %v855 = vpack.c.b16 %v675, %v671
        %v856 = vpack.c.b16 %v676, %v672
        %v857 = vpack.c.b16 %v677, %v673
        %v858 = vpack.c.b16 %v678, %v674
        %v859 = vpack.c.b16 %v683, %v679
        %v860 = vpack.c.b16 %v684, %v680
        %v861 = vpack.c.b16 %v685, %v681
        %v862 = vpack.c.b16 %v686, %v682
        %v863 = vpack.c.b16 %v691, %v687
        %v864 = vpack.c.b16 %v692, %v688
        %v865 = vpack.c.b16 %v693, %v689
        %v866 = vpack.c.b16 %v694, %v690
        %v867 = vpack.c.b16 %v699, %v695
        %v868 = vpack.c.b16 %v700, %v696
        %v869 = vpack.c.b16 %v701, %v697
        %v870 = vpack.c.b16 %v702, %v698
        %v871 = vpack.c.b16 %v707, %v703
        %v872 = vpack.c.b16 %v708, %v704
        %v873 = vpack.c.b16 %v709, %v705
        %v874 = vpack.c.b16 %v710, %v706
        %v875 = vpack.c.b16 %v715, %v711
        %v876 = vpack.c.b16 %v716, %v712
        %v877 = vpack.c.b16 %v717, %v713
        %v878 = vpack.c.b16 %v718, %v714
        %v879 = vpack.c.b16 %v723, %v719
        %v880 = vpack.c.b16 %v724, %v720
        %v881 = vpack.c.b16 %v725, %v721
        %v882 = vpack.c.b16 %v726, %v722
        %v883 = vpack.c.b16 %v731, %v727
        %v884 = vpack.c.b16 %v732, %v728
        %v885 = vpack.c.b16 %v733, %v729
        %v886 = vpack.c.b16 %v734, %v730
        %v887 = vpack.c.b16 %v739, %v735
        %v888 = vpack.c.b16 %v740, %v736
        %v889 = vpack.c.b16 %v741, %v737
        %v890 = vpack.c.b16 %v742, %v738
        %v891 = vpack.c.b16 %v747, %v743
        %v892 = vpack.c.b16 %v748, %v744
        %v893 = vpack.c.b16 %v749, %v745
        %v894 = vpack.c.b16 %v750, %v746
        %v895 = vpack.c.b16 %v755, %v751
        %v896 = vpack.c.b16 %v756, %v752
        %v897 = vpack.c.b16 %v757, %v753
        %v898 = vpack.c.b16 %v758, %v754
        %v899 = vpack.c.b16 %v763, %v759
        %v900 = vpack.c.b16 %v764, %v760
        %v901 = vpack.c.b16 %v765, %v761
        %v902 = vpack.c.b16 %v766, %v762
        %v903 = vpack.c.b16 %v771, %v767
        %v904 = vpack.c.b16 %v772, %v768
        %v905 = vpack.c.b16 %v773, %v769
        %v906 = vpack.c.b16 %v774, %v770
        %v907 = vpack.c.b16 %v779, %v775
        %v908 = vpack.c.b16 %v780, %v776
        %v909 = vpack.c.b16 %v781, %v777
        %v910 = vpack.c.b16 %v782, %v778
        %1039 = vmatprep.subr.bf16.mxu0 %v784
        %1040 = vmatpush1.bf16.msra.mxu0 %v783
        %1041 = vmatprep.subr.bf16.mxu0 %v788
        %1042 = vmatpush1.bf16.msra.mxu0 %v787
        %1043 = vmatprep.subr.bf16.mxu0 %v792
        %1044 = vmatpush1.bf16.msra.mxu0 %v791
        %1045 = vmatprep.subr.bf16.mxu0 %v796
        %1046 = vmatpush1.bf16.msra.mxu0 %v795
        %1047 = vmatprep.subr.bf16.mxu0 %v800
        %1048 = vmatpush1.bf16.msra.mxu0 %v799
        %1049 = vmatprep.subr.bf16.mxu0 %v804
        %1050 = vmatpush1.bf16.msra.mxu0 %v803
        %1051 = vmatprep.subr.bf16.mxu0 %v808
        %1052 = vmatpush1.bf16.msra.mxu0 %v807
        %1053 = vmatprep.subr.bf16.mxu0 %v812
        %1054 = vmatpush1.bf16.msra.mxu0 %v811
        %1055 = vmatprep.subr.bf16.mxu0 %v816
        %1056 = vmatpush1.bf16.msra.mxu0 %v815
        %1057 = vmatprep.subr.bf16.mxu0 %v820
        %1058 = vmatpush1.bf16.msra.mxu0 %v819
        %1059 = vmatprep.subr.bf16.mxu0 %v824
        %1060 = vmatpush1.bf16.msra.mxu0 %v823
        %1061 = vmatprep.subr.bf16.mxu0 %v828
        %1062 = vmatpush1.bf16.msra.mxu0 %v827
        %1063 = vmatprep.subr.bf16.mxu0 %v832
        %1064 = vmatpush1.bf16.msra.mxu0 %v831
        %1065 = vmatprep.subr.bf16.mxu0 %v836
        %1066 = vmatpush1.bf16.msra.mxu0 %v835
        %1067 = vmatprep.subr.bf16.mxu0 %v840
        %1068 = vmatpush1.bf16.msra.mxu0 %v839
        %1069 = vmatprep.subr.bf16.mxu0 %v844
        %1070 = vmatpush1.bf16.msra.mxu0 %v843
        %1071 = vmatprep.mubr.bf16.mxu0 %v392
        %1072 = vmatmul.mubr.bf16.gmra.mrb[0].mxu0 %v391
        %v1073 = vpop.f32.mrb[0].mxu0
        %v1074 = vadd.f32 0.0, %v1073
        %v1075 = vpop.f32.mrb[0].mxu0
        %v1076 = vadd.f32 0.0, %v1075
        %v1077 = vpop.f32.mrb[0].mxu0
        %v1078 = vadd.f32 0.0, %v1077
        %v1079 = vpop.f32.mrb[0].mxu0
        %v1080 = vadd.f32 0.0, %v1079
        %1081 = vdwg.mxu0
        %1082 = vmatprep.subr.bf16.mxu0 %v848
        %1083 = vmatpush1.bf16.msra.mxu0 %v847
        %1084 = vmatprep.subr.bf16.mxu0 %v852
        %1085 = vmatpush1.bf16.msra.mxu0 %v851
        %1086 = vmatprep.subr.bf16.mxu0 %v856
        %1087 = vmatpush1.bf16.msra.mxu0 %v855
        %1088 = vmatprep.subr.bf16.mxu0 %v860
        %1089 = vmatpush1.bf16.msra.mxu0 %v859
        %1090 = vmatprep.subr.bf16.mxu0 %v864
        %1091 = vmatpush1.bf16.msra.mxu0 %v863
        %1092 = vmatprep.subr.bf16.mxu0 %v868
        %1093 = vmatpush1.bf16.msra.mxu0 %v867
        %1094 = vmatprep.subr.bf16.mxu0 %v872
        %1095 = vmatpush1.bf16.msra.mxu0 %v871
        %1096 = vmatprep.subr.bf16.mxu0 %v876
        %1097 = vmatpush1.bf16.msra.mxu0 %v875
        %1098 = vmatprep.subr.bf16.mxu0 %v880
        %1099 = vmatpush1.bf16.msra.mxu0 %v879
        %1100 = vmatprep.subr.bf16.mxu0 %v884
        %1101 = vmatpush1.bf16.msra.mxu0 %v883
        %1102 = vmatprep.subr.bf16.mxu0 %v888
        %1103 = vmatpush1.bf16.msra.mxu0 %v887
        %1104 = vmatprep.subr.bf16.mxu0 %v892
        %1105 = vmatpush1.bf16.msra.mxu0 %v891
        %1106 = vmatprep.subr.bf16.mxu0 %v896
        %1107 = vmatpush1.bf16.msra.mxu0 %v895
        %1108 = vmatprep.subr.bf16.mxu0 %v900
        %1109 = vmatpush1.bf16.msra.mxu0 %v899
        %1110 = vmatprep.subr.bf16.mxu0 %v904
        %1111 = vmatpush1.bf16.msra.mxu0 %v903
        %1112 = vmatprep.subr.bf16.mxu0 %v908
        %1113 = vmatpush1.bf16.msra.mxu0 %v907
        %1114 = vmatprep.mubr.bf16.mxu0 %v394
        %1115 = vmatmul.mubr.bf16.gmra.mrb[0].mxu0 %v393
        %v1116 = vpop.f32.mrb[0].mxu0
        %v1117 = vadd.f32 %v1074, %v1116
        %v1118 = vpop.f32.mrb[0].mxu0
        %v1119 = vadd.f32 %v1076, %v1118
        %v1120 = vpop.f32.mrb[0].mxu0
        %v1121 = vadd.f32 %v1078, %v1120
        %v1122 = vpop.f32.mrb[0].mxu0
        %v1123 = vadd.f32 %v1080, %v1122
        %1124 = vdwg.mxu0
        %1125 = vmatprep.subr.bf16.mxu0 %v786
        %1126 = vmatpush1.bf16.msra.mxu0 %v785
        %1127 = vmatprep.subr.bf16.mxu0 %v790
        %1128 = vmatpush1.bf16.msra.mxu0 %v789
        %1129 = vmatprep.subr.bf16.mxu0 %v794
        %1130 = vmatpush1.bf16.msra.mxu0 %v793
        %1131 = vmatprep.subr.bf16.mxu0 %v798
        %1132 = vmatpush1.bf16.msra.mxu0 %v797
        %1133 = vmatprep.subr.bf16.mxu0 %v802
        %1134 = vmatpush1.bf16.msra.mxu0 %v801
        %1135 = vmatprep.subr.bf16.mxu0 %v806
        %1136 = vmatpush1.bf16.msra.mxu0 %v805
        %1137 = vmatprep.subr.bf16.mxu0 %v810
        %1138 = vmatpush1.bf16.msra.mxu0 %v809
        %1139 = vmatprep.subr.bf16.mxu0 %v814
        %1140 = vmatpush1.bf16.msra.mxu0 %v813
        %1141 = vmatprep.subr.bf16.mxu0 %v818
        %1142 = vmatpush1.bf16.msra.mxu0 %v817
        %1143 = vmatprep.subr.bf16.mxu0 %v822
        %1144 = vmatpush1.bf16.msra.mxu0 %v821
        %1145 = vmatprep.subr.bf16.mxu0 %v826
        %1146 = vmatpush1.bf16.msra.mxu0 %v825
        %1147 = vmatprep.subr.bf16.mxu0 %v830
        %1148 = vmatpush1.bf16.msra.mxu0 %v829
        %1149 = vmatprep.subr.bf16.mxu0 %v834
        %1150 = vmatpush1.bf16.msra.mxu0 %v833
        %1151 = vmatprep.subr.bf16.mxu0 %v838
        %1152 = vmatpush1.bf16.msra.mxu0 %v837
        %1153 = vmatprep.subr.bf16.mxu0 %v842
        %1154 = vmatpush1.bf16.msra.mxu0 %v841
        %1155 = vmatprep.subr.bf16.mxu0 %v846
        %1156 = vmatpush1.bf16.msra.mxu0 %v845
        %1157 = vmatprep.mubr.bf16.mxu0 %v392
        %1158 = vmatmul.mubr.bf16.gmra.mrb[0].mxu0 %v391
        %v1159 = vpop.f32.mrb[0].mxu0
        %v1160 = vadd.f32 0.0, %v1159
        %v1161 = vpop.f32.mrb[0].mxu0
        %v1162 = vadd.f32 0.0, %v1161
        %v1163 = vpop.f32.mrb[0].mxu0
        %v1164 = vadd.f32 0.0, %v1163
        %v1165 = vpop.f32.mrb[0].mxu0
        %v1166 = vadd.f32 0.0, %v1165
        %1167 = vdwg.mxu0
        %1168 = vmatprep.subr.bf16.mxu0 %v850
        %1169 = vmatpush1.bf16.msra.mxu0 %v849
        %1170 = vmatprep.subr.bf16.mxu0 %v854
        %1171 = vmatpush1.bf16.msra.mxu0 %v853
        %1172 = vmatprep.subr.bf16.mxu0 %v858
        %1173 = vmatpush1.bf16.msra.mxu0 %v857
        %1174 = vmatprep.subr.bf16.mxu0 %v862
        %1175 = vmatpush1.bf16.msra.mxu0 %v861
        %1176 = vmatprep.subr.bf16.mxu0 %v866
        %1177 = vmatpush1.bf16.msra.mxu0 %v865
        %1178 = vmatprep.subr.bf16.mxu0 %v870
        %1179 = vmatpush1.bf16.msra.mxu0 %v869
        %1180 = vmatprep.subr.bf16.mxu0 %v874
        %1181 = vmatpush1.bf16.msra.mxu0 %v873
        %1182 = vmatprep.subr.bf16.mxu0 %v878
        %1183 = vmatpush1.bf16.msra.mxu0 %v877
        %1184 = vmatprep.subr.bf16.mxu0 %v882
        %1185 = vmatpush1.bf16.msra.mxu0 %v881
        %1186 = vmatprep.subr.bf16.mxu0 %v886
        %1187 = vmatpush1.bf16.msra.mxu0 %v885
        %1188 = vmatprep.subr.bf16.mxu0 %v890
        %1189 = vmatpush1.bf16.msra.mxu0 %v889
        %1190 = vmatprep.subr.bf16.mxu0 %v894
        %1191 = vmatpush1.bf16.msra.mxu0 %v893
        %1192 = vmatprep.subr.bf16.mxu0 %v898
        %1193 = vmatpush1.bf16.msra.mxu0 %v897
        %1194 = vmatprep.subr.bf16.mxu0 %v902
        %1195 = vmatpush1.bf16.msra.mxu0 %v901
        %1196 = vmatprep.subr.bf16.mxu0 %v906
        %1197 = vmatpush1.bf16.msra.mxu0 %v905
        %1198 = vmatprep.subr.bf16.mxu0 %v910
        %1199 = vmatpush1.bf16.msra.mxu0 %v909
        %1200 = vmatprep.mubr.bf16.mxu0 %v394
        %1201 = vmatmul.mubr.bf16.gmra.mrb[0].mxu0 %v393
        %v1202 = vpop.f32.mrb[0].mxu0
        %v1203 = vadd.f32 %v1160, %v1202
        %v1204 = vpop.f32.mrb[0].mxu0
        %v1205 = vadd.f32 %v1162, %v1204
        %v1206 = vpop.f32.mrb[0].mxu0
        %v1207 = vadd.f32 %v1164, %v1206
        %v1208 = vpop.f32.mrb[0].mxu0
        %v1209 = vadd.f32 %v1166, %v1208
        %1210 = vdwg.mxu0
        %v1211 = vmul.f32 %v1117, %v1117
        %v1212 = vmul.f32 %v1119, %v1119
        %v1213 = vmul.f32 %v1121, %v1121
        %v1214 = vmul.f32 %v1123, %v1123
        %v1215 = vmul.f32 %v1203, %v1203
        %v1216 = vmul.f32 %v1205, %v1205
        %v1217 = vmul.f32 %v1207, %v1207
        %v1218 = vmul.f32 %v1209, %v1209
        %v1219 = vadd.f32 %v1211, %v1215
        %v1220 = vadd.f32 %v1212, %v1216
        %v1221 = vadd.f32 %v1213, %v1217
        %v1222 = vadd.f32 %v1214, %v1218
        %v1223 = vpack.c.bf16 %v1221, %v1219
        %v1224 = vpack.c.bf16 %v1222, %v1220
        %v1225 = vld [vmem:[#allocation10] sm:$0xf]
        %v1226 = vld [vmem:[#allocation10 + $0x4] sm:$0xf]
        %v1227 = vld [vmem:[#allocation10 + $0x8] sm:$0xf]
        %v1228 = vld [vmem:[#allocation10 + $0xc] sm:$0xf]
        %v1229 = vld [vmem:[#allocation10 + $0x10] sm:$0xf]
        %v1230 = vld [vmem:[#allocation10 + $0x14] sm:$0xf]
        %v1231 = vld [vmem:[#allocation10 + $0x18] sm:$0xf]
        %v1232 = vld [vmem:[#allocation10 + $0x1c] sm:$0xf]
        %v1233 = vld [vmem:[#allocation10 + $0x20] sm:$0xf]
        %v1234 = vld [vmem:[#allocation10 + $0x24] sm:$0xf]
        %v1235 = vld [vmem:[#allocation10 + $0x28] sm:$0xf]
        %v1236 = vld [vmem:[#allocation10 + $0x2c] sm:$0xf]
        %v1237 = vld [vmem:[#allocation10 + $0x30] sm:$0xf]
        %v1238 = vld [vmem:[#allocation10 + $0x34] sm:$0xf]
        %v1239 = vld [vmem:[#allocation10 + $0x38] sm:$0xf]
        %v1240 = vld [vmem:[#allocation10 + $0x3c] sm:$0xf]
        %v1241 = vld [vmem:[#allocation10 + $0x40] sm:$0xf]
        %v1242 = vld [vmem:[#allocation10 + $0x44] sm:$0xf]
        %v1243 = vld [vmem:[#allocation10 + $0x48] sm:$0xf]
        %v1244 = vld [vmem:[#allocation10 + $0x4c] sm:$0xf]
        %v1245 = vld [vmem:[#allocation10 + $0x50] sm:$0xf]
        %v1246 = vld [vmem:[#allocation10 + $0x54] sm:$0xf]
        %v1247 = vld [vmem:[#allocation10 + $0x58] sm:$0xf]
        %v1248 = vld [vmem:[#allocation10 + $0x5c] sm:$0xf]
        %v1249 = vld [vmem:[#allocation10 + $0x60] sm:$0xf]
        %v1250 = vld [vmem:[#allocation10 + $0x64] sm:$0xf]
        %v1251 = vld [vmem:[#allocation10 + $0x68] sm:$0xf]
        %v1252 = vld [vmem:[#allocation10 + $0x6c] sm:$0xf]
        %v1253 = vld [vmem:[#allocation10 + $0x70] sm:$0xf]
        %v1254 = vld [vmem:[#allocation10 + $0x74] sm:$0xf]
        %v1255 = vld [vmem:[#allocation10 + $0x78] sm:$0xf]
        %v1256 = vld [vmem:[#allocation10 + $0x7c] sm:$0xf]
        %v1289 = vunpack.c.l.b16 %v1225
        %v1290 = vunpack.c.l.b16 %v1226
        %v1291 = vunpack.c.l.b16 %v1227
        %v1292 = vunpack.c.l.b16 %v1228
        %v1293 = vunpack.c.l.b16 %v1229
        %v1294 = vunpack.c.l.b16 %v1230
        %v1295 = vunpack.c.l.b16 %v1231
        %v1296 = vunpack.c.l.b16 %v1232
        %v1297 = vunpack.c.l.b16 %v1233
        %v1298 = vunpack.c.l.b16 %v1234
        %v1299 = vunpack.c.l.b16 %v1235
        %v1300 = vunpack.c.l.b16 %v1236
        %v1301 = vunpack.c.l.b16 %v1237
        %v1302 = vunpack.c.l.b16 %v1238
        %v1303 = vunpack.c.l.b16 %v1239
        %v1304 = vunpack.c.l.b16 %v1240
        %v1305 = vunpack.c.l.b16 %v1241
        %v1306 = vunpack.c.l.b16 %v1242
        %v1307 = vunpack.c.l.b16 %v1243
        %v1308 = vunpack.c.l.b16 %v1244
        %v1309 = vunpack.c.l.b16 %v1245
        %v1310 = vunpack.c.l.b16 %v1246
        %v1311 = vunpack.c.l.b16 %v1247
        %v1312 = vunpack.c.l.b16 %v1248
        %v1313 = vunpack.c.l.b16 %v1249
        %v1314 = vunpack.c.l.b16 %v1250
        %v1315 = vunpack.c.l.b16 %v1251
        %v1316 = vunpack.c.l.b16 %v1252
        %v1317 = vunpack.c.l.b16 %v1253
        %v1318 = vunpack.c.l.b16 %v1254
        %v1319 = vunpack.c.l.b16 %v1255
        %v1320 = vunpack.c.l.b16 %v1256
        %v1321 = vpack.c.b16 %v1290, %v1289
        %v1322 = vpack.c.b16 %v1292, %v1291
        %v1323 = vpack.c.b16 %v1294, %v1293
        %v1324 = vpack.c.b16 %v1296, %v1295
        %v1325 = vpack.c.b16 %v1298, %v1297
        %v1326 = vpack.c.b16 %v1300, %v1299
        %v1327 = vpack.c.b16 %v1302, %v1301
        %v1328 = vpack.c.b16 %v1304, %v1303
        %v1329 = vpack.c.b16 %v1306, %v1305
        %v1330 = vpack.c.b16 %v1308, %v1307
        %v1331 = vpack.c.b16 %v1310, %v1309
        %v1332 = vpack.c.b16 %v1312, %v1311
        %v1333 = vpack.c.b16 %v1314, %v1313
        %v1334 = vpack.c.b16 %v1316, %v1315
        %v1335 = vpack.c.b16 %v1318, %v1317
        %v1336 = vpack.c.b16 %v1320, %v1319
        %1353 = vmatprep.subr.bf16.mxu0 0
        %1354 = vmatpush1.bf16.msra.mxu0 %v1321
        %1355 = vmatprep.subr.bf16.mxu0 0
        %1356 = vmatpush1.bf16.msra.mxu0 %v1322
        %1357 = vmatprep.subr.bf16.mxu0 0
        %1358 = vmatpush1.bf16.msra.mxu0 %v1323
        %1359 = vmatprep.subr.bf16.mxu0 0
        %1360 = vmatpush1.bf16.msra.mxu0 %v1324
        %1361 = vmatprep.subr.bf16.mxu0 0
        %1362 = vmatpush1.bf16.msra.mxu0 %v1325
        %1363 = vmatprep.subr.bf16.mxu0 0
        %1364 = vmatpush1.bf16.msra.mxu0 %v1326
        %1365 = vmatprep.subr.bf16.mxu0 0
        %1366 = vmatpush1.bf16.msra.mxu0 %v1327
        %1367 = vmatprep.subr.bf16.mxu0 0
        %1368 = vmatpush1.bf16.msra.mxu0 %v1328
        %1369 = vmatprep.subr.bf16.mxu0 0
        %1370 = vmatpush1.bf16.msra.mxu0 %v1329
        %1371 = vmatprep.subr.bf16.mxu0 0
        %1372 = vmatpush1.bf16.msra.mxu0 %v1330
        %1373 = vmatprep.subr.bf16.mxu0 0
        %1374 = vmatpush1.bf16.msra.mxu0 %v1331
        %1375 = vmatprep.subr.bf16.mxu0 0
        %1376 = vmatpush1.bf16.msra.mxu0 %v1332
        %1377 = vmatprep.subr.bf16.mxu0 0
        %1378 = vmatpush1.bf16.msra.mxu0 %v1333
        %1379 = vmatprep.subr.bf16.mxu0 0
        %1380 = vmatpush1.bf16.msra.mxu0 %v1334
        %1381 = vmatprep.subr.bf16.mxu0 0
        %1382 = vmatpush1.bf16.msra.mxu0 %v1335
        %1383 = vmatprep.subr.bf16.mxu0 0
        %1384 = vmatpush1.bf16.msra.mxu0 %v1336
        %1385 = vmatprep.mubr.bf16.mxu0 %v1224
        %1386 = vmatmul.mubr.bf16.gmra.mrb[0].mxu0 %v1223
        %v1387 = vpop.f32.mrb[0].mxu0
        %v1388 = vadd.f32 0.0, %v1387
        %v1389 = vpop.f32.mrb[0].mxu0
        %v1390 = vpop.f32.mrb[0].mxu0
        %v1391 = vadd.f32 0.0, %v1390
        %v1392 = vpop.f32.mrb[0].mxu0
        %1393 = vdwg.mxu0
        %v1394 = vmax.f32 %v1388, 1e-10
        %v1395 = vmax.f32 %v1391, 1e-10
        %v1396 = vlog2.pop %v1394
        %v1397 = vmul.f32 %v1396, 0.6931472
        %v1398 = vlog2.pop %v1395
        %v1399 = vmul.f32 %v1398, 0.6931472
        %v1400 = vmul.f32 %v1397, 0.4342945
        %v1401 = vmul.f32 %v1399, 0.4342945
        %s1402 = smul.u32 %s31, 16
        %s1403 = scalar_lea.vmem %s239, %s1402 [#allocation11]
        %1404 = vst [vmem:[%s1403] sm:$0xff] %v1400
        %1405 = vst [vmem:[%s1403 + $0x8] sm:$0xff] %v1401
        %v1406 = vlaneseq
        %v1407 = vshrl.u32 %v1406, 7
        %v1408 = vadd.s32 %v1407, 8
        %v1409 = vstv %s1402
        %v1410 = vadd.s32 %v1409, %v1407
        %v1411 = vadd.s32 %v1409, %v1408
        %s1412 = sld [smem:[#allocation4 + %s30]]
        %v1413 = vstv %s1412
        %vm1414 = vcmp.lt.s32.totalorder %v1410, %v1413
        %vm1415 = vcmp.lt.s32.totalorder %v1411, %v1413
        %v1416 = vsel %vm1414, 1, 0
        %v1417 = vsel %vm1415, 1, 0
        %vm1418 = vcmp.eq.s32.totalorder %v1416, 1
        %vm1419 = vcmp.eq.s32.totalorder %v1417, 1
        %v1420 = vsel %vm1418, %v1400, -inf
        %v1421 = vsel %vm1419, %v1401, -inf
        %v1422 = vld [vmem:[#allocation2] sm:$0x1]
        %v1423 = vmax.f32 %v1420, %v1421
        %v1424 = vrot.slane %v1423, 4
        %v1425 = vmax.f32 %v1423, %v1424
        %v1426 = vrot.slane %v1425, 2
        %v1427 = vmax.f32 %v1425, %v1426
        %v1428 = vrot.slane %v1427, 1
        %v1429 = vmax.f32 %v1427, %v1428
        %v1430 = vmax.f32 %v1422, %v1429
        %1431 = vst [vmem:[#allocation2] sm:$0x1] %v1430
        // Predicated region
        $region49: #{_forward_impl.1} parent=31 // pred_check
          %p1432 = pneg %p242
        $region50: #{_forward_impl.1} parent=31 // pred_check_branch
          %1434 = sbr.rel (%p1432) target = $region52
        $region51: #{_forward_impl.1} parent=31 // pred_region
          %v1435 = vld [vmem:[#allocation2] sm:$0x1]
          %vm1436 = vcmask 1040384
          %v1437 = vsel %vm1436, %v1435, -inf
          %1438 = vmax.xlane.f32.xlu0 %v1437
          %v1439 = vpop.xlane.xlu0 %1438
          %v1440 = vrot.slane %v1439, 4
          %v1441 = vmax.f32 %v1439, %v1440
          %v1442 = vrot.slane %v1441, 2
          %v1443 = vmax.f32 %v1441, %v1442
          %v1444 = vrot.slane %v1443, 1
          %v1445 = vmax.f32 %v1443, %v1444
          %s1446 = vtos %v1445
          %v1447 = vld [vmem:[%s239] sm:$0xff]
          %v1448 = vld [vmem:[%s239 + $0x8] sm:$0xff]
          %s1449 = ssub.f32 %s1446, 8.0
          %v1450 = vstv %s1449
          %v1451 = vmax.f32 %v1447, %v1450
          %v1452 = vmax.f32 %v1448, %v1450
          %v1453 = vadd.f32 %v1451, 4.0
          %v1454 = vadd.f32 %v1452, 4.0
          %v1455 = vmul.f32 %v1453, 0.25
          %v1456 = vmul.f32 %v1454, 0.25
          %s1457 = sld [smem:[#allocation4 + %s30]]
          %v1458 = vstv %s1457
          %vm1459 = vcmp.lt.s32.totalorder %v1407, %v1458
          %vm1460 = vcmp.lt.s32.totalorder %v1408, %v1458
          %v1461 = vsel %vm1459, 1, 0
          %v1462 = vsel %vm1460, 1, 0
          %vm1463 = vcmp.eq.s32.totalorder %v1461, 1
          %vm1464 = vcmp.eq.s32.totalorder %v1462, 1
          %v1465 = vsel %vm1463, %v1455, 0.0
          %v1466 = vsel %vm1464, %v1456, 0.0
          %1467 = vst [vmem:[%s239] sm:$0xff] %v1465
          %1468 = vst [vmem:[%s239 + $0x8] sm:$0xff] %v1466
        $region52: #{_forward_impl.1} parent=31 // pred_fallthru
          _
        %s1469 = sand.u32 %s116, 1
        %s1470 = scalar_lea.sflag [#allocation7], %s1469
        %s1471 = sand.u32 %s116, 1
        %s1472 = smul.addr %s1471, 16
        %s1473 = scalar_lea.vmem [#allocation11], %s1472
        // Predicated region
        $region53: #{_forward_impl.1} parent=31 // pred_check
          %p1474 = pneg %p126
        $region54: #{_forward_impl.1} parent=31 // pred_check_branch
          %1476 = sbr.rel (%p1474) target = $region56
        $region55: #{_forward_impl.1} parent=31 // pred_region
          %s1478 = ssub.s32 256, 256
          %1479 = vsyncadd %s1470, %s1478
          %s1480 = smul.addr %s30, 2
          %s1481 = smul.addr %s1480, 128
          %s1482 = scalar_lea.hbm %s4, %s1481
          %s1483 = sshll.u32 %s1473, 4
          %s1484 = int_to_ptr.vmem [resolvable:$true] %s1483
          %1489 = dma.vmem_to_hbm [thread:$0]  %s1484, 256, %s1482, %s1470, 128, 128, 8
        $region56: #{_forward_impl.1} parent=31 // pred_fallthru
          _
      $region32: #{_forward_impl.1} parent=5 // pred_fallthru
        _
      %p1490 = scmp.le.s32.totalorder 2, %s21
      // Predicated region
      $region57: #{_forward_impl.1} parent=5 // pred_check
        %p1491 = pneg %p1490
      $region58: #{_forward_impl.1} parent=5 // pred_check_branch
        %1493 = sbr.rel (%p1491) target = $region60
      $region59: #{_forward_impl.1} parent=5 // pred_region
        %s1494 = ssub.s32 %s21, 2
        // Predicated region
        $region61: #{_forward_impl.1} parent=59 // pred_check
          %p1495 = pneg %p132
        $region62: #{_forward_impl.1} parent=59 // pred_check_branch
          %1497 = sbr.rel (%p1495) target = $region64
        $region63: #{_forward_impl.1} parent=59 // pred_region
          %s1498 = sand.u32 %s117, 1
          %s1499 = scalar_lea.sflag [#allocation7], %s1498
          %s1500 = sand.u32 %s117, 1
          %s1501 = smul.addr %s1500, 16
          %s1502 = scalar_lea.vmem [#allocation11], %s1501
          %1503 = dma.done %s1499, 256
        $region64: #{_forward_impl.1} parent=59 // pred_fallthru
          _
      $region60: #{_forward_impl.1} parent=5 // pred_fallthru
        _
    $region6: #{_forward_impl.1} parent=1 // loop_footer
      %s25 = sadd.s32 1, %s21
    $region7: #{_forward_impl.1} parent=1 // loop_footer_branch
      %20 = sbr.rel target = $region3
    $region8: #{_forward_impl.1} parent=1 // loop_exit
      _
    %1504 = vsyncpa [#allocation6], 1
    %s1505 = scalar_lea.sflag [#allocation6], 1
    %1506 = vsyncpa %s1505, 1
    %1507 = vsyncpa [#allocation9], 1
    %1508 = vsyncpa [#allocation7], 1
    %s1509 = scalar_lea.sflag [#allocation7], 1
    %1510 = vsyncpa %s1509, 1

</llo_original>
